<compile_context>
chip_gen: v7x
topology: tpu7x:2x2x1
jax: 0.10.0
libtpu: 0.0.40
codegen_flags: <defaults>
</compile_context>

<pallas_src>
import math

import jax
import jax.numpy as jnp
from jax.experimental import pallas as pl
from jax.experimental.pallas import tpu as pltpu

LN_EPS = 1e-5  # nn.LayerNorm default eps (the module's self.eps is unused in forward)


def slot_init_kernel(cc_ref, ctxh_ref, w1cc_ref, w2_ref, b2_ref, w3_ref, b3_ref, out_ref):
    """One batch block (BB elems): LayerNorm -> MLP(sigmoid) -> weighted cluster sum."""
    BB, C, D = cc_ref.shape
    S = ctxh_ref.shape[0]

    cc3 = cc_ref[...]                                   # [BB, C, D]
    cc = cc3.reshape(BB * C, D)                         # leading-dim collapse

    # LayerNorm over the feature dim.  The affine (gamma/beta) is folded into
    # w1cc_ref / ctxh_ref in the wrapper, so only normalization happens here.
    mean = jnp.mean(cc, axis=-1, keepdims=True)
    var = jnp.mean(jnp.square(cc - mean), axis=-1, keepdims=True)
    cc_hat = (cc - mean) * jax.lax.rsqrt(var + LN_EPS)  # [BB*C, D]

    # pseudo_weights layer 1, cluster half only (concat-split identity):
    #   cat(ctx, gamma*cc_hat+beta) @ W1 + b1
    #     == (ctx @ W1[:D] + b1 + beta @ W1[D:])  +  cc_hat @ (diag(gamma) W1[D:])
    # Both batch-invariant pieces are precomputed in the wrapper (ctxh_ref, w1cc_ref).
    ccn_h = jnp.dot(cc_hat, w1cc_ref[...],
                    preferred_element_type=jnp.float32)            # [BB*C, 2D]

    # h1 rows ordered (b, c, s).  S == 8 == f32 sublane tile, so collapsing the
    # leading (BB*C, S) dims is tile-aligned (no relayout / VMEM copy).
    h1 = jnp.maximum(ccn_h[:, None, :] + ctxh_ref[...][None, :, :], 0.0)  # [BB*C, S, 2D]
    h1 = h1.reshape(BB * C * S, 2 * D)                              # [R, 2D], R = BB*C*S

    h2 = jnp.maximum(
        jnp.dot(h1, w2_ref[...], preferred_element_type=jnp.float32)
        + b2_ref[...], 0.0)                                         # [R, 2D]

    pw = jax.nn.sigmoid(
        jnp.dot(h2, w3_ref[...], preferred_element_type=jnp.float32)
        + b3_ref[...])                                              # [R, D]

    # cc_weighted = pseudo_weights * cluster_centers[:, :, None, :]; sum over clusters.
    pw = pw.reshape(BB, C, S, D)                        # split leading dims: layout-free
    weighted = pw * cc3[:, :, None, :]                  # [BB, C, S, D]  (<= ~0.5 MiB)
    out_ref[...] = jnp.sum(weighted, axis=1).astype(out_ref.dtype)  # [BB, S, D]


def _cdiv(a, b):
    return -(-a // b)


def _plan_batch(B, C, S, D, *, target_rows=2048, vmem_budget_bytes=8 << 20,
                split_rows=2048):
    """Pick (BB, G): batch elements folded per grid step and number of steps.

    * Fold as much batch as possible per step (~target_rows MLP rows) to
      amortize the ~0.35 µs fixed grid-step overhead and fill MXU rows
      (K/N = 2D = 128 already under-fills the 256-wide v6e/v7x MXU, so row
      count is the only fill lever).
    * Cap the fold by a conservative VMEM budget for live f32 intermediates
      so it stays safe under v5e's 16 MiB default scoped VMEM.
    * Only keep >= 2 grid steps (for v7x's two TensorCores) when the total
      work is large; for small batches a single step avoids pure overhead on
      the single-TC v5e/v6e chips.
    """
    rows_per_b = C * S
    # live f32 intermediates per folded batch element: h1 + h2 + pw + weighted + cc + out
    bytes_per_b = 4 * (2 * rows_per_b * 2 * D + 2 * rows_per_b * D + C * D + S * D)
    bb_cap = max(1, min(target_rows // rows_per_b, vmem_budget_bytes // bytes_per_b))

    if B >= 2 and B * rows_per_b >= split_rows:
        bb = min(bb_cap, _cdiv(B, 2))       # keep >= 2 steps: feed both v7x TCs
    else:
        bb = min(bb_cap, B)                 # small work: single grid step
    bb = max(1, bb)
    G = _cdiv(B, bb)
    bb = _cdiv(B, G)                        # rebalance to minimize padding
    return bb, G


def slot_init_forward(cluster_centers, params, num_slots):
    B, C, D = cluster_centers.shape
    S = num_slots

    # --- context_net (tiny, input-independent): plain-JAX glue --------------
    step = 2.0 * math.pi / S                     # 2 * (acos(0) * 2) / num_slots
    cv = jnp.arange(S, dtype=jnp.float32) * step
    context_v = jnp.stack([jnp.sin(cv), jnp.cos(cv)], axis=1)       # [S, 2]
    ctx = jnp.maximum(context_v @ params["wc1"] + params["bc1"], 0.0)
    ctx = ctx @ params["wc2"] + params["bc2"]                        # [S, D]

    # --- hoisted batch-invariant math (layer-1 ctx half + LN affine fold) ---
    w1_ctx = params["w1"][:D, :]                                     # [D, 2D]
    w1_cc_raw = params["w1"][D:, :]                                  # [D, 2D]
    ctx_h = ctx @ w1_ctx + params["b1"] + params["beta"] @ w1_cc_raw  # [S, 2D]
    w1_cc = params["gamma"][:, None] * w1_cc_raw                      # [D, 2D]

    BB, G = _plan_batch(B, C, S, D)
    B_pad = G * BB
    cc_in = cluster_centers
    if B_pad != B:
        # Zero padding is safe: var+eps keeps rsqrt finite, zero centers zero
        # the weighted sum; padded rows are sliced off below.
        cc_in = jnp.pad(cluster_centers, ((0, B_pad - B), (0, 0), (0, 0)))

    def full_spec(shape):
        return pl.BlockSpec(shape, lambda b, _n=len(shape): (0,) * _n)

    out = pl.pallas_call(
        slot_init_kernel,
        out_shape=jax.ShapeDtypeStruct((B_pad, S, D), cluster_centers.dtype),
        grid_spec=pltpu.PrefetchScalarGridSpec(
            num_scalar_prefetch=0,
            grid=(G,),
            in_specs=[
                pl.BlockSpec((BB, C, D), lambda b: (b, 0, 0)),  # cluster_centers
                full_spec((S, 2 * D)),                          # ctx@W1[:D] + b1 + beta@W1[D:]
                full_spec((D, 2 * D)),                          # diag(gamma) @ W1[D:, :]
                full_spec((2 * D, 2 * D)),                      # W2
                full_spec((1, 2 * D)),                          # b2
                full_spec((2 * D, D)),                          # W3
                full_spec((1, D)),                              # b3
            ],
            out_specs=pl.BlockSpec((BB, S, D), lambda b: (b, 0, 0)),
        ),
        # Footprint bounded by _plan_batch's ~8 MiB budget -> default scoped
        # VMEM limit is sufficient on all generations; no vmem_limit_bytes.
        compiler_params=pltpu.CompilerParams(dimension_semantics=("parallel",)),
    )(cc_in, ctx_h, w1_cc,
      params["w2"], params["b2"].reshape(1, 2 * D),
      params["w3"], params["b3"].reshape(1, D))

    return out[:B] if B_pad != B else out


def ref_forward(cc, params, num_slots):
    """Pure-JAX reference mirroring the PyTorch forward exactly."""
    B, C, D = cc.shape
    S = num_slots
    mean = jnp.mean(cc, axis=-1, keepdims=True)
    var = jnp.mean((cc - mean) ** 2, axis=-1, keepdims=True)
    ccn = (cc - mean) / jnp.sqrt(var + LN_EPS) * params["gamma"] + params["beta"]
    step = 2.0 * math.pi / S
    cv = jnp.arange(S, dtype=jnp.float32) * step
    cvec = jnp.stack([jnp.sin(cv), jnp.cos(cv)], axis=1)
    ctx = jnp.maximum(cvec @ params["wc1"] + params["bc1"], 0.0) @ params["wc2"] + params["bc2"]
    ctx_b = jnp.broadcast_to(ctx[None, None], (B, C, S, D))
    ccn_b = jnp.broadcast_to(ccn[:, :, None, :], (B, C, S, D))
    x = jnp.concatenate([ctx_b, ccn_b], axis=-1)
    h = jnp.maximum(x @ params["w1"] + params["b1"], 0.0)
    h = jnp.maximum(h @ params["w2"] + params["b2"], 0.0)
    pw = jax.nn.sigmoid(h @ params["w3"] + params["b3"])
    return jnp.sum(pw * cc[:, :, None, :], axis=1)


if __name__ == "__main__":
    num_slots, num_cluster, slot_dim = 8, 10, 64
    D = slot_dim

    key = jax.random.PRNGKey(0)
    keys = jax.random.split(key, 13)

    def lin(k, fan_in, shape):
        bound = 1.0 / math.sqrt(fan_in)
        return jax.random.uniform(k, shape, jnp.float32, -bound, bound)

    params = dict(
        gamma=jnp.ones((D,), jnp.float32),
        beta=jnp.zeros((D,), jnp.float32),
        # context_net: Linear(2, D), ReLU, Linear(D, D)
        wc1=lin(keys[0], 2, (2, D)), bc1=lin(keys[1], 2, (D,)),
        wc2=lin(keys[2], D, (D, D)), bc2=lin(keys[3], D, (D,)),
        # pseudo_weights: Linear(2D,2D), ReLU, Linear(2D,2D), ReLU, Linear(2D,D), Sigmoid
        w1=lin(keys[4], 2 * D, (2 * D, 2 * D)), b1=lin(keys[5], 2 * D, (2 * D,)),
        w2=lin(keys[6], 2 * D, (2 * D, 2 * D)), b2=lin(keys[7], 2 * D, (2 * D,)),
        w3=lin(keys[8], 2 * D, (2 * D, D)),     b3=lin(keys[9], 2 * D, (D,)),
    )

    # Use non-trivial gamma/beta so the LN-affine fold is actually exercised.
    params["gamma"] = 1.0 + 0.1 * jax.random.normal(keys[12], (D,), jnp.float32)
    params["beta"] = 0.1 * jax.random.normal(keys[11], (D,), jnp.float32)

    # Check 1: batch=4 -> small-work path: BB=4, single grid step.
    cc4 = jax.random.normal(keys[10], (4, num_cluster, slot_dim), jnp.float32)
    out4 = jax.block_until_ready(slot_init_forward(cc4, params, num_slots))
    ref4 = ref_forward(cc4, params, num_slots)
    assert out4.shape == (4, num_slots, slot_dim)
    assert jnp.allclose(out4, ref4, atol=1e-4, rtol=1e-4), float(jnp.max(jnp.abs(out4 - ref4)))

    # Check 2: batch=2 -> BB=2, single grid step.
    cc2 = jax.random.normal(keys[11], (2, num_cluster, slot_dim), jnp.float32)
    out2 = jax.block_until_ready(slot_init_forward(cc2, params, num_slots))
    ref2 = ref_forward(cc2, params, num_slots)
    assert out2.shape == (2, num_slots, slot_dim)
    assert jnp.allclose(out2, ref2, atol=1e-4, rtol=1e-4), float(jnp.max(jnp.abs(out2 - ref2)))

    # Check 3: batch=27 -> large-work path: 2 grid steps (BB=14) with zero-padding
    # to 28 and the output sliced back (exercises the non-divisor handling).
    cc27 = jax.random.normal(keys[12], (27, num_cluster, slot_dim), jnp.float32)
    out27 = jax.block_until_ready(slot_init_forward(cc27, params, num_slots))
    ref27 = ref_forward(cc27, params, num_slots)
    assert out27.shape == (27, num_slots, slot_dim)
    assert jnp.allclose(out27, ref27, atol=1e-4, rtol=1e-4), float(jnp.max(jnp.abs(out27 - ref27)))

    print("KERNEL_OK")
</pallas_src>

<mosaic_0001>
module attributes {stable_mosaic.version = 11 : i64} {
  func.func @slot_init_kernel(%arg0: i32, %arg1: memref<4x10x64xf32, #tpu.memory_space<vmem>>, %arg2: memref<8x128xf32, #tpu.memory_space<vmem>>, %arg3: memref<64x128xf32, #tpu.memory_space<vmem>>, %arg4: memref<128x128xf32, #tpu.memory_space<vmem>>, %arg5: memref<1x128xf32, #tpu.memory_space<vmem>>, %arg6: memref<128x64xf32, #tpu.memory_space<vmem>>, %arg7: memref<1x64xf32, #tpu.memory_space<vmem>>, %arg8: memref<4x8x64xf32, #tpu.memory_space<vmem>>) attributes {dimension_semantics = [#tpu.dimension_semantics<parallel>], iteration_bounds = array<i64: 1>, scalar_prefetch = 0 : i64, scratch_operands = 0 : i64, tpu.core_type = #tpu.core_type<tc>, window_params = [{transform_indices = @transform_0, window_bounds = array<i64: 4, 10, 64>}, {pipeline_mode = #tpu.pipeline_mode<synchronous>, transform_indices = @transform_1, window_bounds = array<i64: 8, 128>}, {pipeline_mode = #tpu.pipeline_mode<synchronous>, transform_indices = @transform_2, window_bounds = array<i64: 64, 128>}, {pipeline_mode = #tpu.pipeline_mode<synchronous>, transform_indices = @transform_3, window_bounds = array<i64: 128, 128>}, {pipeline_mode = #tpu.pipeline_mode<synchronous>, transform_indices = @transform_4, window_bounds = array<i64: 1, 128>}, {pipeline_mode = #tpu.pipeline_mode<synchronous>, transform_indices = @transform_5, window_bounds = array<i64: 128, 64>}, {pipeline_mode = #tpu.pipeline_mode<synchronous>, transform_indices = @transform_6, window_bounds = array<i64: 1, 64>}, {transform_indices = @transform_7, window_bounds = array<i64: 4, 8, 64>}]} {
    %c0 = arith.constant 0 : index
    %c0_0 = arith.constant 0 : index
    %c0_1 = arith.constant 0 : index
    %0 = vector.load %arg1[%c0, %c0_0, %c0_1] : memref<4x10x64xf32, #tpu.memory_space<vmem>>, vector<4x10x64xf32>
    %1 = vector.shape_cast %0 : vector<4x10x64xf32> to vector<40x64xf32>
    %cst = arith.constant dense<0.000000e+00> : vector<40xf32>
    %2 = vector.multi_reduction <add>, %1, %cst [1] : vector<40x64xf32> to vector<40xf32>
    %3 = vector.shape_cast %2 : vector<40xf32> to vector<40x1xf32>
    %cst_2 = arith.constant 6.400000e+01 : f32
    %4 = vector.broadcast %cst_2 : f32 to vector<40x1xf32>
    %5 = arith.divf %3, %4 : vector<40x1xf32>
    %6 = vector.broadcast %5 : vector<40x1xf32> to vector<40x64xf32>
    %7 = arith.subf %1, %6 : vector<40x64xf32>
    %8 = arith.mulf %7, %7 : vector<40x64xf32>
    %cst_3 = arith.constant dense<0.000000e+00> : vector<40xf32>
    %9 = vector.multi_reduction <add>, %8, %cst_3 [1] : vector<40x64xf32> to vector<40xf32>
    %10 = vector.shape_cast %9 : vector<40xf32> to vector<40x1xf32>
    %cst_4 = arith.constant 6.400000e+01 : f32
    %11 = vector.broadcast %cst_4 : f32 to vector<40x1xf32>
    %12 = arith.divf %10, %11 : vector<40x1xf32>
    %13 = vector.broadcast %5 : vector<40x1xf32> to vector<40x64xf32>
    %14 = arith.subf %1, %13 : vector<40x64xf32>
    %cst_5 = arith.constant 9.99999974E-6 : f32
    %15 = vector.broadcast %cst_5 : f32 to vector<40x1xf32>
    %16 = arith.addf %12, %15 : vector<40x1xf32>
    %17 = math.rsqrt %16 : vector<40x1xf32>
    %18 = vector.broadcast %17 : vector<40x1xf32> to vector<40x64xf32>
    %19 = arith.mulf %14, %18 : vector<40x64xf32>
    %c0_6 = arith.constant 0 : index
    %c0_7 = arith.constant 0 : index
    %20 = vector.load %arg3[%c0_6, %c0_7] : memref<64x128xf32, #tpu.memory_space<vmem>>, vector<64x128xf32>
    %cst_8 = arith.constant dense<0.000000e+00> : vector<40x128xf32>
    %21 = tpu.matmul %19, %20, %cst_8 {dimension_numbers = #tpu.dot_dimension_numbers<[1], [0], [0], [1], [0, 0, 1, 1], [], []>} : vector<40x64xf32>, vector<64x128xf32>, vector<40x128xf32> -> vector<40x128xf32>
    %22 = vector.shape_cast %21 : vector<40x128xf32> to vector<40x1x128xf32>
    %c0_9 = arith.constant 0 : index
    %c0_10 = arith.constant 0 : index
    %23 = vector.load %arg2[%c0_9, %c0_10] : memref<8x128xf32, #tpu.memory_space<vmem>>, vector<8x128xf32>
    %24 = vector.shape_cast %23 : vector<8x128xf32> to vector<1x8x128xf32>
    %25 = vector.broadcast %22 : vector<40x1x128xf32> to vector<40x8x128xf32>
    %26 = vector.broadcast %24 : vector<1x8x128xf32> to vector<40x8x128xf32>
    %27 = arith.addf %25, %26 : vector<40x8x128xf32>
    %cst_11 = arith.constant 0.000000e+00 : f32
    %28 = vector.broadcast %cst_11 : f32 to vector<40x8x128xf32>
    %29 = arith.maximumf %27, %28 : vector<40x8x128xf32>
    %30 = vector.shape_cast %29 : vector<40x8x128xf32> to vector<320x128xf32>
    %c0_12 = arith.constant 0 : index
    %c0_13 = arith.constant 0 : index
    %31 = vector.load %arg4[%c0_12, %c0_13] : memref<128x128xf32, #tpu.memory_space<vmem>>, vector<128x128xf32>
    %cst_14 = arith.constant dense<0.000000e+00> : vector<320x128xf32>
    %32 = tpu.matmul %30, %31, %cst_14 {dimension_numbers = #tpu.dot_dimension_numbers<[1], [0], [0], [1], [0, 0, 1, 1], [], []>} : vector<320x128xf32>, vector<128x128xf32>, vector<320x128xf32> -> vector<320x128xf32>
    %c0_15 = arith.constant 0 : index
    %c0_16 = arith.constant 0 : index
    %33 = vector.load %arg5[%c0_15, %c0_16] : memref<1x128xf32, #tpu.memory_space<vmem>>, vector<1x128xf32>
    %34 = vector.broadcast %33 : vector<1x128xf32> to vector<320x128xf32>
    %35 = arith.addf %32, %34 : vector<320x128xf32>
    %cst_17 = arith.constant 0.000000e+00 : f32
    %36 = vector.broadcast %cst_17 : f32 to vector<320x128xf32>
    %37 = arith.maximumf %35, %36 : vector<320x128xf32>
    %c0_18 = arith.constant 0 : index
    %c0_19 = arith.constant 0 : index
    %38 = vector.load %arg6[%c0_18, %c0_19] : memref<128x64xf32, #tpu.memory_space<vmem>>, vector<128x64xf32>
    %cst_20 = arith.constant dense<0.000000e+00> : vector<320x64xf32>
    %39 = tpu.matmul %37, %38, %cst_20 {dimension_numbers = #tpu.dot_dimension_numbers<[1], [0], [0], [1], [0, 0, 1, 1], [], []>} : vector<320x128xf32>, vector<128x64xf32>, vector<320x64xf32> -> vector<320x64xf32>
    %c0_21 = arith.constant 0 : index
    %c0_22 = arith.constant 0 : index
    %40 = vector.load %arg7[%c0_21, %c0_22] : memref<1x64xf32, #tpu.memory_space<vmem>>, vector<1x64xf32>
    %41 = vector.broadcast %40 : vector<1x64xf32> to vector<320x64xf32>
    %42 = arith.addf %39, %41 : vector<320x64xf32>
    %43 = arith.negf %42 : vector<320x64xf32>
    %44 = math.exp %43 : vector<320x64xf32>
    %cst_23 = arith.constant 1.000000e+00 : f32
    %45 = vector.broadcast %cst_23 : f32 to vector<320x64xf32>
    %46 = arith.addf %45, %44 : vector<320x64xf32>
    %47 = arith.divf %45, %46 : vector<320x64xf32>
    %48 = vector.shape_cast %47 : vector<320x64xf32> to vector<4x10x8x64xf32>
    %49 = vector.shape_cast %0 : vector<4x10x64xf32> to vector<4x10x1x64xf32>
    %50 = vector.broadcast %49 : vector<4x10x1x64xf32> to vector<4x10x8x64xf32>
    %51 = arith.mulf %48, %50 : vector<4x10x8x64xf32>
    %cst_24 = arith.constant dense<0.000000e+00> : vector<4x8x64xf32>
    %52 = vector.multi_reduction <add>, %51, %cst_24 [1] : vector<4x10x8x64xf32> to vector<4x8x64xf32>
    %c0_25 = arith.constant 0 : index
    %c0_26 = arith.constant 0 : index
    %c0_27 = arith.constant 0 : index
    %53 = vector.load %arg8[%c0_25, %c0_26, %c0_27] : memref<4x8x64xf32, #tpu.memory_space<vmem>>, vector<4x8x64xf32>
    tpu.vector_store %arg8[%c0_25, %c0_26, %c0_27], %52 {strides = array<i32>} : memref<4x8x64xf32, #tpu.memory_space<vmem>>, vector<4x8x64xf32>,
    return
  }
  func.func @transform_0(%arg0: i32) -> (i32, i32, i32) {
    %c0_i32 = arith.constant 0 : i32
    %c0_i32_0 = arith.constant 0 : i32
    %c0_i32_1 = arith.constant 0 : i32
    return %arg0, %c0_i32, %c0_i32_0 : i32, i32, i32
  }
  func.func @transform_1(%arg0: i32) -> (i32, i32) {
    %c0_i32 = arith.constant 0 : i32
    %c0_i32_0 = arith.constant 0 : i32
    %c0_i32_1 = arith.constant 0 : i32
    return %c0_i32, %c0_i32_0 : i32, i32
  }
  func.func @transform_2(%arg0: i32) -> (i32, i32) {
    %c0_i32 = arith.constant 0 : i32
    %c0_i32_0 = arith.constant 0 : i32
    %c0_i32_1 = arith.constant 0 : i32
    return %c0_i32, %c0_i32_0 : i32, i32
  }
  func.func @transform_3(%arg0: i32) -> (i32, i32) {
    %c0_i32 = arith.constant 0 : i32
    %c0_i32_0 = arith.constant 0 : i32
    %c0_i32_1 = arith.constant 0 : i32
    return %c0_i32, %c0_i32_0 : i32, i32
  }
  func.func @transform_4(%arg0: i32) -> (i32, i32) {
    %c0_i32 = arith.constant 0 : i32
    %c0_i32_0 = arith.constant 0 : i32
    %c0_i32_1 = arith.constant 0 : i32
    return %c0_i32, %c0_i32_0 : i32, i32
  }
  func.func @transform_5(%arg0: i32) -> (i32, i32) {
    %c0_i32 = arith.constant 0 : i32
    %c0_i32_0 = arith.constant 0 : i32
    %c0_i32_1 = arith.constant 0 : i32
    return %c0_i32, %c0_i32_0 : i32, i32
  }
  func.func @transform_6(%arg0: i32) -> (i32, i32) {
    %c0_i32 = arith.constant 0 : i32
    %c0_i32_0 = arith.constant 0 : i32
    %c0_i32_1 = arith.constant 0 : i32
    return %c0_i32, %c0_i32_0 : i32, i32
  }
  func.func @transform_7(%arg0: i32) -> (i32, i32, i32) {
    %c0_i32 = arith.constant 0 : i32
    %c0_i32_0 = arith.constant 0 : i32
    %c0_i32_1 = arith.constant 0 : i32
    return %arg0, %c0_i32, %c0_i32_0 : i32, i32, i32
  }
}

</mosaic_0001>

<llo_original>
// kernel: tpu_custom_call.1
$region0: #{tpu_custom_call.1}
  #allocation0 [shape = 'u32[]', space=smem, size = 0x4, offset = 0x4, fixed_abs, tag = 'smem constant byte address 0x4 - core index']
  #allocation1 [shape = 'u32[144,128]{1,0:T(1,128)}', space=vmem, size = 0x12000, scoped, tag = 'internal scratch']
  %s0 = inlined_call_operand.vmem [shape: f32[4,10,64], index: 0, kind: input, shape index: {}]
  %s1 = inlined_call_operand.vmem [shape: f32[8,128], index: 1, kind: input, shape index: {}]
  %s2 = inlined_call_operand.vmem [shape: f32[64,128], index: 2, kind: input, shape index: {}]
  %s3 = inlined_call_operand.vmem [shape: f32[128,128], index: 3, kind: input, shape index: {}]
  %s4 = inlined_call_operand.vmem [shape: f32[1,128], index: 4, kind: input, shape index: {}]
  %s5 = inlined_call_operand.vmem [shape: f32[128,64], index: 5, kind: input, shape index: {}]
  %s6 = inlined_call_operand.vmem [shape: f32[1,64], index: 6, kind: input, shape index: {}]
  %s7 = inlined_call_operand.hbm [shape: f32[4,8,64], index: 7, kind: output, shape index: {}]
  %s8 = sld [smem:[#allocation0]]
  $region38: #{tpu_custom_call.1} parent=0
    _
  %s10 = ssub.s32 1, %s8
  %s11 = scalar_select 0, %s10, %s8
  $region1: #{tpu_custom_call.1} parent=0
    #allocation2 [shape = 'u8[16384]{0}', space=vmem, size = 0x4000, scoped, tag = 'output window, operand 0, single buffered']
    #allocation3 [shape = 's32[1]{0}', space=sflag, size = 0x4, scoped, tag = 'scoped memory for tpu_custom_call.1']
    %12 = vsyncpa [#allocation3], 0
    // Predicated region
    $region2: #{tpu_custom_call.1} parent=1 // pred_check
      _
    $region3: #{tpu_custom_call.1} parent=1 // pred_check_branch
      %14 = sbr.rel (0) target = $region5
    $region4: #{tpu_custom_call.1} parent=1 // pred_region
      _
    $region5: #{tpu_custom_call.1} parent=1 // pred_fallthru
      _
    // Predicated region
    $region6: #{tpu_custom_call.1} parent=1 // pred_check
      _
    $region7: #{tpu_custom_call.1} parent=1 // pred_check_branch
      %16 = sbr.rel (0) target = $region9
    $region8: #{tpu_custom_call.1} parent=1 // pred_region
      _
    $region9: #{tpu_custom_call.1} parent=1 // pred_fallthru
      _
    // Predicated region
    $region10: #{tpu_custom_call.1} parent=1 // pred_check
      _
    $region11: #{tpu_custom_call.1} parent=1 // pred_check_branch
      %18 = sbr.rel (0) target = $region13
    $region12: #{tpu_custom_call.1} parent=1 // pred_region
      _
    $region13: #{tpu_custom_call.1} parent=1 // pred_fallthru
      _
    // Predicated region
    $region14: #{tpu_custom_call.1} parent=1 // pred_check
      _
    $region15: #{tpu_custom_call.1} parent=1 // pred_check_branch
      %20 = sbr.rel (0) target = $region17
    $region16: #{tpu_custom_call.1} parent=1 // pred_region
      _
    $region17: #{tpu_custom_call.1} parent=1 // pred_fallthru
      _
    // Predicated region
    $region18: #{tpu_custom_call.1} parent=1 // pred_check
      _
    $region19: #{tpu_custom_call.1} parent=1 // pred_check_branch
      %22 = sbr.rel (0) target = $region21
    $region20: #{tpu_custom_call.1} parent=1 // pred_region
      _
    $region21: #{tpu_custom_call.1} parent=1 // pred_fallthru
      _
    // Predicated region
    $region22: #{tpu_custom_call.1} parent=1 // pred_check
      _
    $region23: #{tpu_custom_call.1} parent=1 // pred_check_branch
      %24 = sbr.rel (0) target = $region25
    $region24: #{tpu_custom_call.1} parent=1 // pred_region
      _
    $region25: #{tpu_custom_call.1} parent=1 // pred_fallthru
      _
    // Predicated region
    $region26: #{tpu_custom_call.1} parent=1 // pred_check
      _
    $region27: #{tpu_custom_call.1} parent=1 // pred_check_branch
      %26 = sbr.rel (0) target = $region29
    $region28: #{tpu_custom_call.1} parent=1 // pred_region
      _
    $region29: #{tpu_custom_call.1} parent=1 // pred_fallthru
      _
    %v27 = vld [vmem:[%s0] sm:$0xff]
    %v28 = vld [vmem:[%s0 + $0x8] sm:$0x3]
    %v29 = vld [vmem:[%s0 + $0x10] sm:$0xff]
    %v30 = vld [vmem:[%s0 + $0x18] sm:$0x3]
    %v31 = vld [vmem:[%s0 + $0x20] sm:$0xff]
    %v32 = vld [vmem:[%s0 + $0x28] sm:$0x3]
    %v33 = vld [vmem:[%s0 + $0x30] sm:$0xff]
    %v34 = vld [vmem:[%s0 + $0x38] sm:$0x3]
    %v43 = vcombine.high %v27, %v27
    %v45 = vunpack.c.l.s4 1983009808
    %v46 = vunpack.c.0.s8 %v45
    %v47 = vlaneseq
    %v48 = vshrl.u32 %v47, 7
    %v49 = vsub.s32 %v46, %v48
    %v50 = vrot.slane %v27, %v49
    %v52 = vunpack.c.l.s4 1983009808
    %v53 = vunpack.c.0.s8 %v52
    %v54 = vlaneseq
    %v55 = vshrl.u32 %v54, 7
    %v56 = vsub.s32 %v53, %v55
    %v57 = vrot.slane %v43, %v56
    %v58 = vcombine.high %v50, %v50
    %v59 = vcombine.high %v57, %v57
    %v61 = vunpack.c.l.s4 1983009808
    %v62 = vunpack.c.0.s8 %v61
    %v63 = vlaneseq
    %v64 = vshrl.u32 %v63, 7
    %v65 = vsub.s32 %v62, %v64
    %v66 = vrot.slane %v28, %v65
    %v67 = vcombine.high %v29, %v29
    %v69 = vunpack.c.l.s4 1983009808
    %v70 = vunpack.c.0.s8 %v69
    %v71 = vlaneseq
    %v72 = vshrl.u32 %v71, 7
    %v73 = vsub.s32 %v70, %v72
    %v74 = vrot.slane %v29, %v73
    %v76 = vunpack.c.l.s4 1983009808
    %v77 = vunpack.c.0.s8 %v76
    %v78 = vlaneseq
    %v79 = vshrl.u32 %v78, 7
    %v80 = vsub.s32 %v77, %v79
    %v81 = vrot.slane %v67, %v80
    %v82 = vcombine.high %v74, %v74
    %v83 = vcombine.high %v81, %v81
    %v85 = vunpack.c.l.s4 1983009808
    %v86 = vunpack.c.0.s8 %v85
    %v87 = vlaneseq
    %v88 = vshrl.u32 %v87, 7
    %v89 = vsub.s32 %v86, %v88
    %v90 = vrot.slane %v30, %v89
    %v91 = vcombine.high %v31, %v31
    %v93 = vunpack.c.l.s4 1983009808
    %v94 = vunpack.c.0.s8 %v93
    %v95 = vlaneseq
    %v96 = vshrl.u32 %v95, 7
    %v97 = vsub.s32 %v94, %v96
    %v98 = vrot.slane %v31, %v97
    %v100 = vunpack.c.l.s4 1983009808
    %v101 = vunpack.c.0.s8 %v100
    %v102 = vlaneseq
    %v103 = vshrl.u32 %v102, 7
    %v104 = vsub.s32 %v101, %v103
    %v105 = vrot.slane %v91, %v104
    %v106 = vcombine.high %v98, %v98
    %v107 = vcombine.high %v105, %v105
    %v109 = vunpack.c.l.s4 1983009808
    %v110 = vunpack.c.0.s8 %v109
    %v111 = vlaneseq
    %v112 = vshrl.u32 %v111, 7
    %v113 = vsub.s32 %v110, %v112
    %v114 = vrot.slane %v32, %v113
    %v115 = vcombine.high %v33, %v33
    %v117 = vunpack.c.l.s4 1983009808
    %v118 = vunpack.c.0.s8 %v117
    %v119 = vlaneseq
    %v120 = vshrl.u32 %v119, 7
    %v121 = vsub.s32 %v118, %v120
    %v122 = vrot.slane %v33, %v121
    %v124 = vunpack.c.l.s4 1983009808
    %v125 = vunpack.c.0.s8 %v124
    %v126 = vlaneseq
    %v127 = vshrl.u32 %v126, 7
    %v128 = vsub.s32 %v125, %v127
    %v129 = vrot.slane %v115, %v128
    %v130 = vcombine.high %v122, %v122
    %v131 = vcombine.high %v129, %v129
    %v133 = vunpack.c.l.s4 1983009808
    %v134 = vunpack.c.0.s8 %v133
    %v135 = vlaneseq
    %v136 = vshrl.u32 %v135, 7
    %v137 = vsub.s32 %v134, %v136
    %v138 = vrot.slane %v34, %v137
    %v159 = vcombine.low %v50, %v58
    %v160 = vcombine.low %v57, %v59
    %v162 = vunpack.c.l.s4 1983009808
    %v163 = vunpack.c.0.s8 %v162
    %v164 = vlaneseq
    %v165 = vshrl.u32 %v164, 7
    %v166 = vsub.s32 %v163, %v165
    %v167 = vrot.slane %v159, %v166
    %v169 = vunpack.c.l.s4 1983009808
    %v170 = vunpack.c.0.s8 %v169
    %v171 = vlaneseq
    %v172 = vshrl.u32 %v171, 7
    %v173 = vsub.s32 %v170, %v172
    %v174 = vrot.slane %v160, %v173
    %v175 = vcombine.low %v167, %v174
    %v176 = vcombine.low %v66, %v74
    %v177 = vcombine.low %v82, %v81
    %v179 = vunpack.c.l.s4 1983009808
    %v180 = vunpack.c.0.s8 %v179
    %v181 = vlaneseq
    %v182 = vshrl.u32 %v181, 7
    %v183 = vsub.s32 %v180, %v182
    %v184 = vrot.slane %v176, %v183
    %v186 = vunpack.c.l.s4 1983009808
    %v187 = vunpack.c.0.s8 %v186
    %v188 = vlaneseq
    %v189 = vshrl.u32 %v188, 7
    %v190 = vsub.s32 %v187, %v189
    %v191 = vrot.slane %v177, %v190
    %v192 = vcombine.low %v184, %v191
    %v193 = vcombine.low %v83, %v90
    %v194 = vcombine.low %v98, %v106
    %v196 = vunpack.c.l.s4 1983009808
    %v197 = vunpack.c.0.s8 %v196
    %v198 = vlaneseq
    %v199 = vshrl.u32 %v198, 7
    %v200 = vsub.s32 %v197, %v199
    %v201 = vrot.slane %v193, %v200
    %v203 = vunpack.c.l.s4 1983009808
    %v204 = vunpack.c.0.s8 %v203
    %v205 = vlaneseq
    %v206 = vshrl.u32 %v205, 7
    %v207 = vsub.s32 %v204, %v206
    %v208 = vrot.slane %v194, %v207
    %v209 = vcombine.low %v201, %v208
    %v210 = vcombine.low %v105, %v107
    %v211 = vcombine.low %v114, %v122
    %v213 = vunpack.c.l.s4 1983009808
    %v214 = vunpack.c.0.s8 %v213
    %v215 = vlaneseq
    %v216 = vshrl.u32 %v215, 7
    %v217 = vsub.s32 %v214, %v216
    %v218 = vrot.slane %v210, %v217
    %v220 = vunpack.c.l.s4 1983009808
    %v221 = vunpack.c.0.s8 %v220
    %v222 = vlaneseq
    %v223 = vshrl.u32 %v222, 7
    %v224 = vsub.s32 %v221, %v223
    %v225 = vrot.slane %v211, %v224
    %v226 = vcombine.low %v218, %v225
    %v227 = vcombine.low %v130, %v129
    %v228 = vcombine.low %v131, %v138
    %v230 = vunpack.c.l.s4 1983009808
    %v231 = vunpack.c.0.s8 %v230
    %v232 = vlaneseq
    %v233 = vshrl.u32 %v232, 7
    %v234 = vsub.s32 %v231, %v233
    %v235 = vrot.slane %v227, %v234
    %v237 = vunpack.c.l.s4 1983009808
    %v238 = vunpack.c.0.s8 %v237
    %v239 = vlaneseq
    %v240 = vshrl.u32 %v239, 7
    %v241 = vsub.s32 %v238, %v240
    %v242 = vrot.slane %v228, %v241
    %v243 = vcombine.low %v235, %v242
    %vm249 = vcmask 523264
    %v250 = vsel %vm249, %v175, 0.0
    %251 = vadd.xlane.f32.xlu0 %v250
    %v252 = vpop.xlane.xlu0 %251
    %v253 = vsel %vm249, %v192, 0.0
    %254 = vadd.xlane.f32.xlu0 %v253
    %v255 = vpop.xlane.xlu0 %254
    %v256 = vsel %vm249, %v209, 0.0
    %257 = vadd.xlane.f32.xlu0 %v256
    %v258 = vpop.xlane.xlu0 %257
    %v259 = vsel %vm249, %v226, 0.0
    %260 = vadd.xlane.f32.xlu0 %v259
    %v261 = vpop.xlane.xlu0 %260
    %v262 = vsel %vm249, %v243, 0.0
    %263 = vadd.xlane.f32.xlu0 %v262
    %v264 = vpop.xlane.xlu0 %263
    %v265 = vrcp.pop 64.0
    %v266 = vmul.f32 %v252, %v265
    %v267 = vmul.f32 %v255, %v265
    %v268 = vmul.f32 %v258, %v265
    %v269 = vmul.f32 %v261, %v265
    %v270 = vmul.f32 %v264, %v265
    %v277 = vunpack.c.l.s4 269488144
    %v278 = vunpack.c.0.s8 %v277
    %v279 = vlaneseq
    %v280 = vshrl.u32 %v279, 7
    %v281 = vsub.s32 %v278, %v280
    %v282 = vrot.slane %v266, %v281
    %v284 = vunpack.c.l.s4 842150450
    %v285 = vunpack.c.0.s8 %v284
    %v286 = vlaneseq
    %v287 = vshrl.u32 %v286, 7
    %v288 = vsub.s32 %v285, %v287
    %v289 = vrot.slane %v266, %v288
    %v291 = vunpack.c.l.s4 1414812756
    %v292 = vunpack.c.0.s8 %v291
    %v293 = vlaneseq
    %v294 = vshrl.u32 %v293, 7
    %v295 = vsub.s32 %v292, %v294
    %v296 = vrot.slane %v266, %v295
    %v298 = vunpack.c.l.s4 1987475062
    %v299 = vunpack.c.0.s8 %v298
    %v300 = vlaneseq
    %v301 = vshrl.u32 %v300, 7
    %v302 = vsub.s32 %v299, %v301
    %v303 = vrot.slane %v266, %v302
    %v305 = vunpack.c.l.s4 269488144
    %v306 = vunpack.c.0.s8 %v305
    %v307 = vlaneseq
    %v308 = vshrl.u32 %v307, 7
    %v309 = vsub.s32 %v306, %v308
    %v310 = vrot.slane %v267, %v309
    %v312 = vunpack.c.l.s4 842150450
    %v313 = vunpack.c.0.s8 %v312
    %v314 = vlaneseq
    %v315 = vshrl.u32 %v314, 7
    %v316 = vsub.s32 %v313, %v315
    %v317 = vrot.slane %v267, %v316
    %v319 = vunpack.c.l.s4 1414812756
    %v320 = vunpack.c.0.s8 %v319
    %v321 = vlaneseq
    %v322 = vshrl.u32 %v321, 7
    %v323 = vsub.s32 %v320, %v322
    %v324 = vrot.slane %v267, %v323
    %v326 = vunpack.c.l.s4 1987475062
    %v327 = vunpack.c.0.s8 %v326
    %v328 = vlaneseq
    %v329 = vshrl.u32 %v328, 7
    %v330 = vsub.s32 %v327, %v329
    %v331 = vrot.slane %v267, %v330
    %v333 = vunpack.c.l.s4 269488144
    %v334 = vunpack.c.0.s8 %v333
    %v335 = vlaneseq
    %v336 = vshrl.u32 %v335, 7
    %v337 = vsub.s32 %v334, %v336
    %v338 = vrot.slane %v268, %v337
    %v340 = vunpack.c.l.s4 842150450
    %v341 = vunpack.c.0.s8 %v340
    %v342 = vlaneseq
    %v343 = vshrl.u32 %v342, 7
    %v344 = vsub.s32 %v341, %v343
    %v345 = vrot.slane %v268, %v344
    %v347 = vunpack.c.l.s4 1414812756
    %v348 = vunpack.c.0.s8 %v347
    %v349 = vlaneseq
    %v350 = vshrl.u32 %v349, 7
    %v351 = vsub.s32 %v348, %v350
    %v352 = vrot.slane %v268, %v351
    %v354 = vunpack.c.l.s4 1987475062
    %v355 = vunpack.c.0.s8 %v354
    %v356 = vlaneseq
    %v357 = vshrl.u32 %v356, 7
    %v358 = vsub.s32 %v355, %v357
    %v359 = vrot.slane %v268, %v358
    %v361 = vunpack.c.l.s4 269488144
    %v362 = vunpack.c.0.s8 %v361
    %v363 = vlaneseq
    %v364 = vshrl.u32 %v363, 7
    %v365 = vsub.s32 %v362, %v364
    %v366 = vrot.slane %v269, %v365
    %v368 = vunpack.c.l.s4 842150450
    %v369 = vunpack.c.0.s8 %v368
    %v370 = vlaneseq
    %v371 = vshrl.u32 %v370, 7
    %v372 = vsub.s32 %v369, %v371
    %v373 = vrot.slane %v269, %v372
    %v375 = vunpack.c.l.s4 1414812756
    %v376 = vunpack.c.0.s8 %v375
    %v377 = vlaneseq
    %v378 = vshrl.u32 %v377, 7
    %v379 = vsub.s32 %v376, %v378
    %v380 = vrot.slane %v269, %v379
    %v382 = vunpack.c.l.s4 1987475062
    %v383 = vunpack.c.0.s8 %v382
    %v384 = vlaneseq
    %v385 = vshrl.u32 %v384, 7
    %v386 = vsub.s32 %v383, %v385
    %v387 = vrot.slane %v269, %v386
    %v389 = vunpack.c.l.s4 269488144
    %v390 = vunpack.c.0.s8 %v389
    %v391 = vlaneseq
    %v392 = vshrl.u32 %v391, 7
    %v393 = vsub.s32 %v390, %v392
    %v394 = vrot.slane %v270, %v393
    %v396 = vunpack.c.l.s4 842150450
    %v397 = vunpack.c.0.s8 %v396
    %v398 = vlaneseq
    %v399 = vshrl.u32 %v398, 7
    %v400 = vsub.s32 %v397, %v399
    %v401 = vrot.slane %v270, %v400
    %v403 = vunpack.c.l.s4 1414812756
    %v404 = vunpack.c.0.s8 %v403
    %v405 = vlaneseq
    %v406 = vshrl.u32 %v405, 7
    %v407 = vsub.s32 %v404, %v406
    %v408 = vrot.slane %v270, %v407
    %v410 = vunpack.c.l.s4 1987475062
    %v411 = vunpack.c.0.s8 %v410
    %v412 = vlaneseq
    %v413 = vshrl.u32 %v412, 7
    %v414 = vsub.s32 %v411, %v413
    %v415 = vrot.slane %v270, %v414
    %v436 = vsub.f32 %v50, %v282
    %v437 = vsub.f32 %v58, %v289
    %v438 = vsub.f32 %v57, %v296
    %v439 = vsub.f32 %v59, %v303
    %v440 = vsub.f32 %v66, %v310
    %v441 = vsub.f32 %v74, %v317
    %v442 = vsub.f32 %v82, %v324
    %v443 = vsub.f32 %v81, %v331
    %v444 = vsub.f32 %v83, %v338
    %v445 = vsub.f32 %v90, %v345
    %v446 = vsub.f32 %v98, %v352
    %v447 = vsub.f32 %v106, %v359
    %v448 = vsub.f32 %v105, %v366
    %v449 = vsub.f32 %v107, %v373
    %v450 = vsub.f32 %v114, %v380
    %v451 = vsub.f32 %v122, %v387
    %v452 = vsub.f32 %v130, %v394
    %v453 = vsub.f32 %v129, %v401
    %v454 = vsub.f32 %v131, %v408
    %v455 = vsub.f32 %v138, %v415
    %v456 = vmul.f32 %v436, %v436
    %v457 = vmul.f32 %v437, %v437
    %v458 = vmul.f32 %v438, %v438
    %v459 = vmul.f32 %v439, %v439
    %v460 = vmul.f32 %v440, %v440
    %v461 = vmul.f32 %v441, %v441
    %v462 = vmul.f32 %v442, %v442
    %v463 = vmul.f32 %v443, %v443
    %v464 = vmul.f32 %v444, %v444
    %v465 = vmul.f32 %v445, %v445
    %v466 = vmul.f32 %v446, %v446
    %v467 = vmul.f32 %v447, %v447
    %v468 = vmul.f32 %v448, %v448
    %v469 = vmul.f32 %v449, %v449
    %v470 = vmul.f32 %v450, %v450
    %v471 = vmul.f32 %v451, %v451
    %v472 = vmul.f32 %v452, %v452
    %v473 = vmul.f32 %v453, %v453
    %v474 = vmul.f32 %v454, %v454
    %v475 = vmul.f32 %v455, %v455
    %v496 = vcombine.low %v456, %v457
    %v497 = vcombine.low %v458, %v459
    %v499 = vunpack.c.l.s4 1983009808
    %v500 = vunpack.c.0.s8 %v499
    %v501 = vlaneseq
    %v502 = vshrl.u32 %v501, 7
    %v503 = vsub.s32 %v500, %v502
    %v504 = vrot.slane %v496, %v503
    %v506 = vunpack.c.l.s4 1983009808
    %v507 = vunpack.c.0.s8 %v506
    %v508 = vlaneseq
    %v509 = vshrl.u32 %v508, 7
    %v510 = vsub.s32 %v507, %v509
    %v511 = vrot.slane %v497, %v510
    %v512 = vcombine.low %v504, %v511
    %v513 = vcombine.low %v460, %v461
    %v514 = vcombine.low %v462, %v463
    %v516 = vunpack.c.l.s4 1983009808
    %v517 = vunpack.c.0.s8 %v516
    %v518 = vlaneseq
    %v519 = vshrl.u32 %v518, 7
    %v520 = vsub.s32 %v517, %v519
    %v521 = vrot.slane %v513, %v520
    %v523 = vunpack.c.l.s4 1983009808
    %v524 = vunpack.c.0.s8 %v523
    %v525 = vlaneseq
    %v526 = vshrl.u32 %v525, 7
    %v527 = vsub.s32 %v524, %v526
    %v528 = vrot.slane %v514, %v527
    %v529 = vcombine.low %v521, %v528
    %v530 = vcombine.low %v464, %v465
    %v531 = vcombine.low %v466, %v467
    %v533 = vunpack.c.l.s4 1983009808
    %v534 = vunpack.c.0.s8 %v533
    %v535 = vlaneseq
    %v536 = vshrl.u32 %v535, 7
    %v537 = vsub.s32 %v534, %v536
    %v538 = vrot.slane %v530, %v537
    %v540 = vunpack.c.l.s4 1983009808
    %v541 = vunpack.c.0.s8 %v540
    %v542 = vlaneseq
    %v543 = vshrl.u32 %v542, 7
    %v544 = vsub.s32 %v541, %v543
    %v545 = vrot.slane %v531, %v544
    %v546 = vcombine.low %v538, %v545
    %v547 = vcombine.low %v468, %v469
    %v548 = vcombine.low %v470, %v471
    %v550 = vunpack.c.l.s4 1983009808
    %v551 = vunpack.c.0.s8 %v550
    %v552 = vlaneseq
    %v553 = vshrl.u32 %v552, 7
    %v554 = vsub.s32 %v551, %v553
    %v555 = vrot.slane %v547, %v554
    %v557 = vunpack.c.l.s4 1983009808
    %v558 = vunpack.c.0.s8 %v557
    %v559 = vlaneseq
    %v560 = vshrl.u32 %v559, 7
    %v561 = vsub.s32 %v558, %v560
    %v562 = vrot.slane %v548, %v561
    %v563 = vcombine.low %v555, %v562
    %v564 = vcombine.low %v472, %v473
    %v565 = vcombine.low %v474, %v475
    %v567 = vunpack.c.l.s4 1983009808
    %v568 = vunpack.c.0.s8 %v567
    %v569 = vlaneseq
    %v570 = vshrl.u32 %v569, 7
    %v571 = vsub.s32 %v568, %v570
    %v572 = vrot.slane %v564, %v571
    %v574 = vunpack.c.l.s4 1983009808
    %v575 = vunpack.c.0.s8 %v574
    %v576 = vlaneseq
    %v577 = vshrl.u32 %v576, 7
    %v578 = vsub.s32 %v575, %v577
    %v579 = vrot.slane %v565, %v578
    %v580 = vcombine.low %v572, %v579
    %v586 = vsel %vm249, %v512, 0.0
    %587 = vadd.xlane.f32.xlu0 %v586
    %v588 = vpop.xlane.xlu0 %587
    %v589 = vsel %vm249, %v529, 0.0
    %590 = vadd.xlane.f32.xlu0 %v589
    %v591 = vpop.xlane.xlu0 %590
    %v592 = vsel %vm249, %v546, 0.0
    %593 = vadd.xlane.f32.xlu0 %v592
    %v594 = vpop.xlane.xlu0 %593
    %v595 = vsel %vm249, %v563, 0.0
    %596 = vadd.xlane.f32.xlu0 %v595
    %v597 = vpop.xlane.xlu0 %596
    %v598 = vsel %vm249, %v580, 0.0
    %599 = vadd.xlane.f32.xlu0 %v598
    %v600 = vpop.xlane.xlu0 %599
    %v601 = vmul.f32 %v588, %v265
    %v602 = vmul.f32 %v591, %v265
    %v603 = vmul.f32 %v594, %v265
    %v604 = vmul.f32 %v597, %v265
    %v605 = vmul.f32 %v600, %v265
    %v606 = vadd.f32 %v601, 1e-05
    %v607 = vadd.f32 %v602, 1e-05
    %v608 = vadd.f32 %v603, 1e-05
    %v609 = vadd.f32 %v604, 1e-05
    %v610 = vadd.f32 %v605, 1e-05
    %v611 = vrsqrt.pop %v606
    %v612 = vrsqrt.pop %v607
    %v613 = vrsqrt.pop %v608
    %v614 = vrsqrt.pop %v609
    %v615 = vrsqrt.pop %v610
    %v622 = vunpack.c.l.s4 269488144
    %v623 = vunpack.c.0.s8 %v622
    %v624 = vlaneseq
    %v625 = vshrl.u32 %v624, 7
    %v626 = vsub.s32 %v623, %v625
    %v627 = vrot.slane %v611, %v626
    %v629 = vunpack.c.l.s4 842150450
    %v630 = vunpack.c.0.s8 %v629
    %v631 = vlaneseq
    %v632 = vshrl.u32 %v631, 7
    %v633 = vsub.s32 %v630, %v632
    %v634 = vrot.slane %v611, %v633
    %v636 = vunpack.c.l.s4 1414812756
    %v637 = vunpack.c.0.s8 %v636
    %v638 = vlaneseq
    %v639 = vshrl.u32 %v638, 7
    %v640 = vsub.s32 %v637, %v639
    %v641 = vrot.slane %v611, %v640
    %v643 = vunpack.c.l.s4 1987475062
    %v644 = vunpack.c.0.s8 %v643
    %v645 = vlaneseq
    %v646 = vshrl.u32 %v645, 7
    %v647 = vsub.s32 %v644, %v646
    %v648 = vrot.slane %v611, %v647
    %v650 = vunpack.c.l.s4 269488144
    %v651 = vunpack.c.0.s8 %v650
    %v652 = vlaneseq
    %v653 = vshrl.u32 %v652, 7
    %v654 = vsub.s32 %v651, %v653
    %v655 = vrot.slane %v612, %v654
    %v657 = vunpack.c.l.s4 842150450
    %v658 = vunpack.c.0.s8 %v657
    %v659 = vlaneseq
    %v660 = vshrl.u32 %v659, 7
    %v661 = vsub.s32 %v658, %v660
    %v662 = vrot.slane %v612, %v661
    %v664 = vunpack.c.l.s4 1414812756
    %v665 = vunpack.c.0.s8 %v664
    %v666 = vlaneseq
    %v667 = vshrl.u32 %v666, 7
    %v668 = vsub.s32 %v665, %v667
    %v669 = vrot.slane %v612, %v668
    %v671 = vunpack.c.l.s4 1987475062
    %v672 = vunpack.c.0.s8 %v671
    %v673 = vlaneseq
    %v674 = vshrl.u32 %v673, 7
    %v675 = vsub.s32 %v672, %v674
    %v676 = vrot.slane %v612, %v675
    %v678 = vunpack.c.l.s4 269488144
    %v679 = vunpack.c.0.s8 %v678
    %v680 = vlaneseq
    %v681 = vshrl.u32 %v680, 7
    %v682 = vsub.s32 %v679, %v681
    %v683 = vrot.slane %v613, %v682
    %v685 = vunpack.c.l.s4 842150450
    %v686 = vunpack.c.0.s8 %v685
    %v687 = vlaneseq
    %v688 = vshrl.u32 %v687, 7
    %v689 = vsub.s32 %v686, %v688
    %v690 = vrot.slane %v613, %v689
    %v692 = vunpack.c.l.s4 1414812756
    %v693 = vunpack.c.0.s8 %v692
    %v694 = vlaneseq
    %v695 = vshrl.u32 %v694, 7
    %v696 = vsub.s32 %v693, %v695
    %v697 = vrot.slane %v613, %v696
    %v699 = vunpack.c.l.s4 1987475062
    %v700 = vunpack.c.0.s8 %v699
    %v701 = vlaneseq
    %v702 = vshrl.u32 %v701, 7
    %v703 = vsub.s32 %v700, %v702
    %v704 = vrot.slane %v613, %v703
    %v706 = vunpack.c.l.s4 269488144
    %v707 = vunpack.c.0.s8 %v706
    %v708 = vlaneseq
    %v709 = vshrl.u32 %v708, 7
    %v710 = vsub.s32 %v707, %v709
    %v711 = vrot.slane %v614, %v710
    %v713 = vunpack.c.l.s4 842150450
    %v714 = vunpack.c.0.s8 %v713
    %v715 = vlaneseq
    %v716 = vshrl.u32 %v715, 7
    %v717 = vsub.s32 %v714, %v716
    %v718 = vrot.slane %v614, %v717
    %v720 = vunpack.c.l.s4 1414812756
    %v721 = vunpack.c.0.s8 %v720
    %v722 = vlaneseq
    %v723 = vshrl.u32 %v722, 7
    %v724 = vsub.s32 %v721, %v723
    %v725 = vrot.slane %v614, %v724
    %v727 = vunpack.c.l.s4 1987475062
    %v728 = vunpack.c.0.s8 %v727
    %v729 = vlaneseq
    %v730 = vshrl.u32 %v729, 7
    %v731 = vsub.s32 %v728, %v730
    %v732 = vrot.slane %v614, %v731
    %v734 = vunpack.c.l.s4 269488144
    %v735 = vunpack.c.0.s8 %v734
    %v736 = vlaneseq
    %v737 = vshrl.u32 %v736, 7
    %v738 = vsub.s32 %v735, %v737
    %v739 = vrot.slane %v615, %v738
    %v741 = vunpack.c.l.s4 842150450
    %v742 = vunpack.c.0.s8 %v741
    %v743 = vlaneseq
    %v744 = vshrl.u32 %v743, 7
    %v745 = vsub.s32 %v742, %v744
    %v746 = vrot.slane %v615, %v745
    %v748 = vunpack.c.l.s4 1414812756
    %v749 = vunpack.c.0.s8 %v748
    %v750 = vlaneseq
    %v751 = vshrl.u32 %v750, 7
    %v752 = vsub.s32 %v749, %v751
    %v753 = vrot.slane %v615, %v752
    %v755 = vunpack.c.l.s4 1987475062
    %v756 = vunpack.c.0.s8 %v755
    %v757 = vlaneseq
    %v758 = vshrl.u32 %v757, 7
    %v759 = vsub.s32 %v756, %v758
    %v760 = vrot.slane %v615, %v759
    %v781 = vmul.f32 %v436, %v627
    %v782 = vmul.f32 %v437, %v634
    %v783 = vmul.f32 %v438, %v641
    %v784 = vmul.f32 %v439, %v648
    %v785 = vmul.f32 %v440, %v655
    %v786 = vmul.f32 %v441, %v662
    %v787 = vmul.f32 %v442, %v669
    %v788 = vmul.f32 %v443, %v676
    %v789 = vmul.f32 %v444, %v683
    %v790 = vmul.f32 %v445, %v690
    %v791 = vmul.f32 %v446, %v697
    %v792 = vmul.f32 %v447, %v704
    %v793 = vmul.f32 %v448, %v711
    %v794 = vmul.f32 %v449, %v718
    %v795 = vmul.f32 %v450, %v725
    %v796 = vmul.f32 %v451, %v732
    %v797 = vmul.f32 %v452, %v739
    %v798 = vmul.f32 %v453, %v746
    %v799 = vmul.f32 %v454, %v753
    %v800 = vmul.f32 %v455, %v760
    %v801 = vld [vmem:[%s2] sm:$0xff]
    %v802 = vld [vmem:[%s2 + $0x8] sm:$0xff]
    %v803 = vld [vmem:[%s2 + $0x10] sm:$0xff]
    %v804 = vld [vmem:[%s2 + $0x18] sm:$0xff]
    %v805 = vld [vmem:[%s2 + $0x20] sm:$0xff]
    %v806 = vld [vmem:[%s2 + $0x28] sm:$0xff]
    %v807 = vld [vmem:[%s2 + $0x30] sm:$0xff]
    %v808 = vld [vmem:[%s2 + $0x38] sm:$0xff]
    %v829 = vcombine.low %v781, %v782
    %v830 = vcombine.low %v783, %v784
    %v832 = vunpack.c.l.s4 1983009808
    %v833 = vunpack.c.0.s8 %v832
    %v834 = vlaneseq
    %v835 = vshrl.u32 %v834, 7
    %v836 = vsub.s32 %v833, %v835
    %v837 = vrot.slane %v829, %v836
    %v839 = vunpack.c.l.s4 1983009808
    %v840 = vunpack.c.0.s8 %v839
    %v841 = vlaneseq
    %v842 = vshrl.u32 %v841, 7
    %v843 = vsub.s32 %v840, %v842
    %v844 = vrot.slane %v830, %v843
    %v845 = vcombine.low %v837, %v844
    %v846 = vcombine.low %v785, %v786
    %v847 = vcombine.low %v787, %v788
    %v849 = vunpack.c.l.s4 1983009808
    %v850 = vunpack.c.0.s8 %v849
    %v851 = vlaneseq
    %v852 = vshrl.u32 %v851, 7
    %v853 = vsub.s32 %v850, %v852
    %v854 = vrot.slane %v846, %v853
    %v856 = vunpack.c.l.s4 1983009808
    %v857 = vunpack.c.0.s8 %v856
    %v858 = vlaneseq
    %v859 = vshrl.u32 %v858, 7
    %v860 = vsub.s32 %v857, %v859
    %v861 = vrot.slane %v847, %v860
    %v862 = vcombine.low %v854, %v861
    %v863 = vcombine.low %v789, %v790
    %v864 = vcombine.low %v791, %v792
    %v866 = vunpack.c.l.s4 1983009808
    %v867 = vunpack.c.0.s8 %v866
    %v868 = vlaneseq
    %v869 = vshrl.u32 %v868, 7
    %v870 = vsub.s32 %v867, %v869
    %v871 = vrot.slane %v863, %v870
    %v873 = vunpack.c.l.s4 1983009808
    %v874 = vunpack.c.0.s8 %v873
    %v875 = vlaneseq
    %v876 = vshrl.u32 %v875, 7
    %v877 = vsub.s32 %v874, %v876
    %v878 = vrot.slane %v864, %v877
    %v879 = vcombine.low %v871, %v878
    %v880 = vcombine.low %v793, %v794
    %v881 = vcombine.low %v795, %v796
    %v883 = vunpack.c.l.s4 1983009808
    %v884 = vunpack.c.0.s8 %v883
    %v885 = vlaneseq
    %v886 = vshrl.u32 %v885, 7
    %v887 = vsub.s32 %v884, %v886
    %v888 = vrot.slane %v880, %v887
    %v890 = vunpack.c.l.s4 1983009808
    %v891 = vunpack.c.0.s8 %v890
    %v892 = vlaneseq
    %v893 = vshrl.u32 %v892, 7
    %v894 = vsub.s32 %v891, %v893
    %v895 = vrot.slane %v881, %v894
    %v896 = vcombine.low %v888, %v895
    %v897 = vcombine.low %v797, %v798
    %v898 = vcombine.low %v799, %v800
    %v900 = vunpack.c.l.s4 1983009808
    %v901 = vunpack.c.0.s8 %v900
    %v902 = vlaneseq
    %v903 = vshrl.u32 %v902, 7
    %v904 = vsub.s32 %v901, %v903
    %v905 = vrot.slane %v897, %v904
    %v907 = vunpack.c.l.s4 1983009808
    %v908 = vunpack.c.0.s8 %v907
    %v909 = vlaneseq
    %v910 = vshrl.u32 %v909, 7
    %v911 = vsub.s32 %v908, %v910
    %v912 = vrot.slane %v898, %v911
    %v913 = vcombine.low %v905, %v912
    %v914 = vsel %vm249, %v845, 0
    %v916 = vsel %vm249, %v862, 0
    %v918 = vsel %vm249, %v879, 0
    %v920 = vsel %vm249, %v896, 0
    %v922 = vsel %vm249, %v913, 0
    %924 = vmatprep.subr.mxu0 0.0
    %925 = vmatpush1.msra.mxu0 %v801
    %926 = vmatprep.subr.mxu0 0.0
    %927 = vmatpush1.msra.mxu0 %v802
    %928 = vmatprep.subr.mxu0 0.0
    %929 = vmatpush1.msra.mxu0 %v803
    %930 = vmatprep.subr.mxu0 0.0
    %931 = vmatpush1.msra.mxu0 %v804
    %932 = vmatprep.subr.mxu0 0.0
    %933 = vmatpush1.msra.mxu0 %v805
    %934 = vmatprep.subr.mxu0 0.0
    %935 = vmatpush1.msra.mxu0 %v806
    %936 = vmatprep.subr.mxu0 0.0
    %937 = vmatpush1.msra.mxu0 %v807
    %938 = vmatprep.subr.mxu0 0.0
    %939 = vmatpush1.msra.mxu0 %v808
    %940 = vmatprep.subr.mxu0 0.0
    %941 = vmatpush1.msra.mxu0 0.0
    %942 = vmatprep.subr.mxu0 0.0
    %943 = vmatpush1.msra.mxu0 0.0
    %944 = vmatprep.subr.mxu0 0.0
    %945 = vmatpush1.msra.mxu0 0.0
    %946 = vmatprep.subr.mxu0 0.0
    %947 = vmatpush1.msra.mxu0 0.0
    %948 = vmatprep.subr.mxu0 0.0
    %949 = vmatpush1.msra.mxu0 0.0
    %950 = vmatprep.subr.mxu0 0.0
    %951 = vmatpush1.msra.mxu0 0.0
    %952 = vmatprep.subr.mxu0 0.0
    %953 = vmatpush1.msra.mxu0 0.0
    %954 = vmatprep.subr.mxu0 0.0
    %955 = vmatpush1.msra.mxu0 0.0
    %956 = vmatprep.subr.mxu0 0.0
    %957 = vmatpush1.msra.mxu0 0.0
    %958 = vmatprep.subr.mxu0 0.0
    %959 = vmatpush1.msra.mxu0 0.0
    %960 = vmatprep.subr.mxu0 0.0
    %961 = vmatpush1.msra.mxu0 0.0
    %962 = vmatprep.subr.mxu0 0.0
    %963 = vmatpush1.msra.mxu0 0.0
    %964 = vmatprep.subr.mxu0 0.0
    %965 = vmatpush1.msra.mxu0 0.0
    %966 = vmatprep.subr.mxu0 0.0
    %967 = vmatpush1.msra.mxu0 0.0
    %968 = vmatprep.subr.mxu0 0.0
    %969 = vmatpush1.msra.mxu0 0.0
    %970 = vmatprep.subr.mxu0 0.0
    %971 = vmatpush1.msra.mxu0 0.0
    %972 = vmatprep.subr.mxu0 0.0
    %973 = vmatpush1.msra.mxu0 0.0
    %974 = vmatprep.subr.mxu0 0.0
    %975 = vmatpush1.msra.mxu0 0.0
    %976 = vmatprep.subr.mxu0 0.0
    %977 = vmatpush1.msra.mxu0 0.0
    %978 = vmatprep.subr.mxu0 0.0
    %979 = vmatpush1.msra.mxu0 0.0
    %980 = vmatprep.subr.mxu0 0.0
    %981 = vmatpush1.msra.mxu0 0.0
    %982 = vmatprep.subr.mxu0 0.0
    %983 = vmatpush1.msra.mxu0 0.0
    %984 = vmatprep.subr.mxu0 0.0
    %985 = vmatpush1.msra.mxu0 0.0
    %986 = vmatprep.subr.mxu0 0.0
    %987 = vmatpush1.msra.mxu0 0.0
    %988 = vmatprep.mubr.f32.mxu0 0.0
    %989 = vmatmul.mubr.f32.gmra.mrb[0].mxu0 %v914
    %v990 = vpop.f32.mrb[0].mxu0
    %v991 = vadd.f32 0.0, %v990
    %v992 = vpop.f32.mrb[0].mxu0
    %993 = vmatprep.mubr.f32.mxu0 0.0
    %994 = vmatmul.mubr.f32.gmra.mrb[0].mxu0 %v916
    %v995 = vpop.f32.mrb[0].mxu0
    %v996 = vadd.f32 0.0, %v995
    %v997 = vpop.f32.mrb[0].mxu0
    %998 = vmatprep.mubr.f32.mxu0 0.0
    %999 = vmatmul.mubr.f32.gmra.mrb[0].mxu0 %v918
    %v1000 = vpop.f32.mrb[0].mxu0
    %v1001 = vadd.f32 0.0, %v1000
    %v1002 = vpop.f32.mrb[0].mxu0
    %1003 = vmatprep.mubr.f32.mxu0 0.0
    %1004 = vmatmul.mubr.f32.gmra.mrb[0].mxu0 %v920
    %v1005 = vpop.f32.mrb[0].mxu0
    %v1006 = vadd.f32 0.0, %v1005
    %v1007 = vpop.f32.mrb[0].mxu0
    %1008 = vmatprep.mubr.f32.mxu0 0.0
    %1009 = vmatmul.mubr.f32.gmra.mrb[0].mxu0 %v922
    %v1010 = vpop.f32.mrb[0].mxu0
    %v1011 = vadd.f32 0.0, %v1010
    %v1012 = vpop.f32.mrb[0].mxu0
    %1013 = vdwg.mxu0
    %v1019 = vcombine.high %v991, %v991
    %v1021 = vunpack.c.l.s4 1966171168
    %v1022 = vunpack.c.0.s8 %v1021
    %v1023 = vlaneseq
    %v1024 = vshrl.u32 %v1023, 7
    %v1025 = vsub.s32 %v1022, %v1024
    %v1026 = vrot.slane %v991, %v1025
    %v1028 = vunpack.c.l.s4 1966171168
    %v1029 = vunpack.c.0.s8 %v1028
    %v1030 = vlaneseq
    %v1031 = vshrl.u32 %v1030, 7
    %v1032 = vsub.s32 %v1029, %v1031
    %v1033 = vrot.slane %v1019, %v1032
    %v1034 = vcombine.high %v1026, %v1026
    %v1035 = vcombine.high %v1033, %v1033
    %v1037 = vunpack.c.l.s4 1966171168
    %v1038 = vunpack.c.0.s8 %v1037
    %v1039 = vlaneseq
    %v1040 = vshrl.u32 %v1039, 7
    %v1041 = vsub.s32 %v1038, %v1040
    %v1042 = vrot.slane %v1026, %v1041
    %v1044 = vunpack.c.l.s4 1966171168
    %v1045 = vunpack.c.0.s8 %v1044
    %v1046 = vlaneseq
    %v1047 = vshrl.u32 %v1046, 7
    %v1048 = vsub.s32 %v1045, %v1047
    %v1049 = vrot.slane %v1033, %v1048
    %v1051 = vunpack.c.l.s4 1966171168
    %v1052 = vunpack.c.0.s8 %v1051
    %v1053 = vlaneseq
    %v1054 = vshrl.u32 %v1053, 7
    %v1055 = vsub.s32 %v1052, %v1054
    %v1056 = vrot.slane %v1034, %v1055
    %v1058 = vunpack.c.l.s4 1966171168
    %v1059 = vunpack.c.0.s8 %v1058
    %v1060 = vlaneseq
    %v1061 = vshrl.u32 %v1060, 7
    %v1062 = vsub.s32 %v1059, %v1061
    %v1063 = vrot.slane %v1035, %v1062
    %v1064 = vcombine.high %v1042, %v1042
    %v1065 = vcombine.high %v1049, %v1049
    %v1066 = vcombine.high %v1056, %v1056
    %v1067 = vcombine.high %v1063, %v1063
    %v1068 = vcombine.high %v996, %v996
    %v1070 = vunpack.c.l.s4 1966171168
    %v1071 = vunpack.c.0.s8 %v1070
    %v1072 = vlaneseq
    %v1073 = vshrl.u32 %v1072, 7
    %v1074 = vsub.s32 %v1071, %v1073
    %v1075 = vrot.slane %v996, %v1074
    %v1077 = vunpack.c.l.s4 1966171168
    %v1078 = vunpack.c.0.s8 %v1077
    %v1079 = vlaneseq
    %v1080 = vshrl.u32 %v1079, 7
    %v1081 = vsub.s32 %v1078, %v1080
    %v1082 = vrot.slane %v1068, %v1081
    %v1083 = vcombine.high %v1075, %v1075
    %v1084 = vcombine.high %v1082, %v1082
    %v1086 = vunpack.c.l.s4 1966171168
    %v1087 = vunpack.c.0.s8 %v1086
    %v1088 = vlaneseq
    %v1089 = vshrl.u32 %v1088, 7
    %v1090 = vsub.s32 %v1087, %v1089
    %v1091 = vrot.slane %v1075, %v1090
    %v1093 = vunpack.c.l.s4 1966171168
    %v1094 = vunpack.c.0.s8 %v1093
    %v1095 = vlaneseq
    %v1096 = vshrl.u32 %v1095, 7
    %v1097 = vsub.s32 %v1094, %v1096
    %v1098 = vrot.slane %v1082, %v1097
    %v1100 = vunpack.c.l.s4 1966171168
    %v1101 = vunpack.c.0.s8 %v1100
    %v1102 = vlaneseq
    %v1103 = vshrl.u32 %v1102, 7
    %v1104 = vsub.s32 %v1101, %v1103
    %v1105 = vrot.slane %v1083, %v1104
    %v1107 = vunpack.c.l.s4 1966171168
    %v1108 = vunpack.c.0.s8 %v1107
    %v1109 = vlaneseq
    %v1110 = vshrl.u32 %v1109, 7
    %v1111 = vsub.s32 %v1108, %v1110
    %v1112 = vrot.slane %v1084, %v1111
    %v1113 = vcombine.high %v1091, %v1091
    %v1114 = vcombine.high %v1098, %v1098
    %v1115 = vcombine.high %v1105, %v1105
    %v1116 = vcombine.high %v1112, %v1112
    %v1117 = vcombine.high %v1001, %v1001
    %v1119 = vunpack.c.l.s4 1966171168
    %v1120 = vunpack.c.0.s8 %v1119
    %v1121 = vlaneseq
    %v1122 = vshrl.u32 %v1121, 7
    %v1123 = vsub.s32 %v1120, %v1122
    %v1124 = vrot.slane %v1001, %v1123
    %v1126 = vunpack.c.l.s4 1966171168
    %v1127 = vunpack.c.0.s8 %v1126
    %v1128 = vlaneseq
    %v1129 = vshrl.u32 %v1128, 7
    %v1130 = vsub.s32 %v1127, %v1129
    %v1131 = vrot.slane %v1117, %v1130
    %v1132 = vcombine.high %v1124, %v1124
    %v1133 = vcombine.high %v1131, %v1131
    %v1135 = vunpack.c.l.s4 1966171168
    %v1136 = vunpack.c.0.s8 %v1135
    %v1137 = vlaneseq
    %v1138 = vshrl.u32 %v1137, 7
    %v1139 = vsub.s32 %v1136, %v1138
    %v1140 = vrot.slane %v1124, %v1139
    %v1142 = vunpack.c.l.s4 1966171168
    %v1143 = vunpack.c.0.s8 %v1142
    %v1144 = vlaneseq
    %v1145 = vshrl.u32 %v1144, 7
    %v1146 = vsub.s32 %v1143, %v1145
    %v1147 = vrot.slane %v1131, %v1146
    %v1149 = vunpack.c.l.s4 1966171168
    %v1150 = vunpack.c.0.s8 %v1149
    %v1151 = vlaneseq
    %v1152 = vshrl.u32 %v1151, 7
    %v1153 = vsub.s32 %v1150, %v1152
    %v1154 = vrot.slane %v1132, %v1153
    %v1156 = vunpack.c.l.s4 1966171168
    %v1157 = vunpack.c.0.s8 %v1156
    %v1158 = vlaneseq
    %v1159 = vshrl.u32 %v1158, 7
    %v1160 = vsub.s32 %v1157, %v1159
    %v1161 = vrot.slane %v1133, %v1160
    %v1162 = vcombine.high %v1140, %v1140
    %v1163 = vcombine.high %v1147, %v1147
    %v1164 = vcombine.high %v1154, %v1154
    %v1165 = vcombine.high %v1161, %v1161
    %v1166 = vcombine.high %v1006, %v1006
    %v1168 = vunpack.c.l.s4 1966171168
    %v1169 = vunpack.c.0.s8 %v1168
    %v1170 = vlaneseq
    %v1171 = vshrl.u32 %v1170, 7
    %v1172 = vsub.s32 %v1169, %v1171
    %v1173 = vrot.slane %v1006, %v1172
    %v1175 = vunpack.c.l.s4 1966171168
    %v1176 = vunpack.c.0.s8 %v1175
    %v1177 = vlaneseq
    %v1178 = vshrl.u32 %v1177, 7
    %v1179 = vsub.s32 %v1176, %v1178
    %v1180 = vrot.slane %v1166, %v1179
    %v1181 = vcombine.high %v1173, %v1173
    %v1182 = vcombine.high %v1180, %v1180
    %v1184 = vunpack.c.l.s4 1966171168
    %v1185 = vunpack.c.0.s8 %v1184
    %v1186 = vlaneseq
    %v1187 = vshrl.u32 %v1186, 7
    %v1188 = vsub.s32 %v1185, %v1187
    %v1189 = vrot.slane %v1173, %v1188
    %v1191 = vunpack.c.l.s4 1966171168
    %v1192 = vunpack.c.0.s8 %v1191
    %v1193 = vlaneseq
    %v1194 = vshrl.u32 %v1193, 7
    %v1195 = vsub.s32 %v1192, %v1194
    %v1196 = vrot.slane %v1180, %v1195
    %v1198 = vunpack.c.l.s4 1966171168
    %v1199 = vunpack.c.0.s8 %v1198
    %v1200 = vlaneseq
    %v1201 = vshrl.u32 %v1200, 7
    %v1202 = vsub.s32 %v1199, %v1201
    %v1203 = vrot.slane %v1181, %v1202
    %v1205 = vunpack.c.l.s4 1966171168
    %v1206 = vunpack.c.0.s8 %v1205
    %v1207 = vlaneseq
    %v1208 = vshrl.u32 %v1207, 7
    %v1209 = vsub.s32 %v1206, %v1208
    %v1210 = vrot.slane %v1182, %v1209
    %v1211 = vcombine.high %v1189, %v1189
    %v1212 = vcombine.high %v1196, %v1196
    %v1213 = vcombine.high %v1203, %v1203
    %v1214 = vcombine.high %v1210, %v1210
    %v1215 = vcombine.high %v1011, %v1011
    %v1217 = vunpack.c.l.s4 1966171168
    %v1218 = vunpack.c.0.s8 %v1217
    %v1219 = vlaneseq
    %v1220 = vshrl.u32 %v1219, 7
    %v1221 = vsub.s32 %v1218, %v1220
    %v1222 = vrot.slane %v1011, %v1221
    %v1224 = vunpack.c.l.s4 1966171168
    %v1225 = vunpack.c.0.s8 %v1224
    %v1226 = vlaneseq
    %v1227 = vshrl.u32 %v1226, 7
    %v1228 = vsub.s32 %v1225, %v1227
    %v1229 = vrot.slane %v1215, %v1228
    %v1230 = vcombine.high %v1222, %v1222
    %v1231 = vcombine.high %v1229, %v1229
    %v1233 = vunpack.c.l.s4 1966171168
    %v1234 = vunpack.c.0.s8 %v1233
    %v1235 = vlaneseq
    %v1236 = vshrl.u32 %v1235, 7
    %v1237 = vsub.s32 %v1234, %v1236
    %v1238 = vrot.slane %v1222, %v1237
    %v1240 = vunpack.c.l.s4 1966171168
    %v1241 = vunpack.c.0.s8 %v1240
    %v1242 = vlaneseq
    %v1243 = vshrl.u32 %v1242, 7
    %v1244 = vsub.s32 %v1241, %v1243
    %v1245 = vrot.slane %v1229, %v1244
    %v1247 = vunpack.c.l.s4 1966171168
    %v1248 = vunpack.c.0.s8 %v1247
    %v1249 = vlaneseq
    %v1250 = vshrl.u32 %v1249, 7
    %v1251 = vsub.s32 %v1248, %v1250
    %v1252 = vrot.slane %v1230, %v1251
    %v1254 = vunpack.c.l.s4 1966171168
    %v1255 = vunpack.c.0.s8 %v1254
    %v1256 = vlaneseq
    %v1257 = vshrl.u32 %v1256, 7
    %v1258 = vsub.s32 %v1255, %v1257
    %v1259 = vrot.slane %v1231, %v1258
    %v1260 = vcombine.high %v1238, %v1238
    %v1261 = vcombine.high %v1245, %v1245
    %v1262 = vcombine.high %v1252, %v1252
    %v1263 = vcombine.high %v1259, %v1259
    %v1264 = vld [vmem:[%s1] sm:$0xff]
    %v1265 = vlaneseq
    %v1266 = vshrl.u32 %v1265, 7
    %v1267 = vsub.s32 0, %v1266
    %v1268 = vrot.slane %v1042, %v1267
    %v1269 = vlaneseq
    %v1270 = vshrl.u32 %v1269, 7
    %v1271 = vsub.s32 0, %v1270
    %v1272 = vrot.slane %v1056, %v1271
    %v1273 = vlaneseq
    %v1274 = vshrl.u32 %v1273, 7
    %v1275 = vsub.s32 0, %v1274
    %v1276 = vrot.slane %v1064, %v1275
    %v1277 = vlaneseq
    %v1278 = vshrl.u32 %v1277, 7
    %v1279 = vsub.s32 0, %v1278
    %v1280 = vrot.slane %v1066, %v1279
    %v1281 = vlaneseq
    %v1282 = vshrl.u32 %v1281, 7
    %v1283 = vsub.s32 0, %v1282
    %v1284 = vrot.slane %v1049, %v1283
    %v1285 = vlaneseq
    %v1286 = vshrl.u32 %v1285, 7
    %v1287 = vsub.s32 0, %v1286
    %v1288 = vrot.slane %v1063, %v1287
    %v1289 = vlaneseq
    %v1290 = vshrl.u32 %v1289, 7
    %v1291 = vsub.s32 0, %v1290
    %v1292 = vrot.slane %v1065, %v1291
    %v1293 = vlaneseq
    %v1294 = vshrl.u32 %v1293, 7
    %v1295 = vsub.s32 0, %v1294
    %v1296 = vrot.slane %v1067, %v1295
    %v1297 = vlaneseq
    %v1298 = vshrl.u32 %v1297, 7
    %v1299 = vsub.s32 0, %v1298
    %v1300 = vrot.slane %v1091, %v1299
    %v1301 = vlaneseq
    %v1302 = vshrl.u32 %v1301, 7
    %v1303 = vsub.s32 0, %v1302
    %v1304 = vrot.slane %v1105, %v1303
    %v1305 = vlaneseq
    %v1306 = vshrl.u32 %v1305, 7
    %v1307 = vsub.s32 0, %v1306
    %v1308 = vrot.slane %v1113, %v1307
    %v1309 = vlaneseq
    %v1310 = vshrl.u32 %v1309, 7
    %v1311 = vsub.s32 0, %v1310
    %v1312 = vrot.slane %v1115, %v1311
    %v1313 = vlaneseq
    %v1314 = vshrl.u32 %v1313, 7
    %v1315 = vsub.s32 0, %v1314
    %v1316 = vrot.slane %v1098, %v1315
    %v1317 = vlaneseq
    %v1318 = vshrl.u32 %v1317, 7
    %v1319 = vsub.s32 0, %v1318
    %v1320 = vrot.slane %v1112, %v1319
    %v1321 = vlaneseq
    %v1322 = vshrl.u32 %v1321, 7
    %v1323 = vsub.s32 0, %v1322
    %v1324 = vrot.slane %v1114, %v1323
    %v1325 = vlaneseq
    %v1326 = vshrl.u32 %v1325, 7
    %v1327 = vsub.s32 0, %v1326
    %v1328 = vrot.slane %v1116, %v1327
    %v1329 = vlaneseq
    %v1330 = vshrl.u32 %v1329, 7
    %v1331 = vsub.s32 0, %v1330
    %v1332 = vrot.slane %v1140, %v1331
    %v1333 = vlaneseq
    %v1334 = vshrl.u32 %v1333, 7
    %v1335 = vsub.s32 0, %v1334
    %v1336 = vrot.slane %v1154, %v1335
    %v1337 = vlaneseq
    %v1338 = vshrl.u32 %v1337, 7
    %v1339 = vsub.s32 0, %v1338
    %v1340 = vrot.slane %v1162, %v1339
    %v1341 = vlaneseq
    %v1342 = vshrl.u32 %v1341, 7
    %v1343 = vsub.s32 0, %v1342
    %v1344 = vrot.slane %v1164, %v1343
    %v1345 = vlaneseq
    %v1346 = vshrl.u32 %v1345, 7
    %v1347 = vsub.s32 0, %v1346
    %v1348 = vrot.slane %v1147, %v1347
    %v1349 = vlaneseq
    %v1350 = vshrl.u32 %v1349, 7
    %v1351 = vsub.s32 0, %v1350
    %v1352 = vrot.slane %v1161, %v1351
    %v1353 = vlaneseq
    %v1354 = vshrl.u32 %v1353, 7
    %v1355 = vsub.s32 0, %v1354
    %v1356 = vrot.slane %v1163, %v1355
    %v1357 = vlaneseq
    %v1358 = vshrl.u32 %v1357, 7
    %v1359 = vsub.s32 0, %v1358
    %v1360 = vrot.slane %v1165, %v1359
    %v1361 = vlaneseq
    %v1362 = vshrl.u32 %v1361, 7
    %v1363 = vsub.s32 0, %v1362
    %v1364 = vrot.slane %v1189, %v1363
    %v1365 = vlaneseq
    %v1366 = vshrl.u32 %v1365, 7
    %v1367 = vsub.s32 0, %v1366
    %v1368 = vrot.slane %v1203, %v1367
    %v1369 = vlaneseq
    %v1370 = vshrl.u32 %v1369, 7
    %v1371 = vsub.s32 0, %v1370
    %v1372 = vrot.slane %v1211, %v1371
    %v1373 = vlaneseq
    %v1374 = vshrl.u32 %v1373, 7
    %v1375 = vsub.s32 0, %v1374
    %v1376 = vrot.slane %v1213, %v1375
    %v1377 = vlaneseq
    %v1378 = vshrl.u32 %v1377, 7
    %v1379 = vsub.s32 0, %v1378
    %v1380 = vrot.slane %v1196, %v1379
    %v1381 = vlaneseq
    %v1382 = vshrl.u32 %v1381, 7
    %v1383 = vsub.s32 0, %v1382
    %v1384 = vrot.slane %v1210, %v1383
    %v1385 = vlaneseq
    %v1386 = vshrl.u32 %v1385, 7
    %v1387 = vsub.s32 0, %v1386
    %v1388 = vrot.slane %v1212, %v1387
    %v1389 = vlaneseq
    %v1390 = vshrl.u32 %v1389, 7
    %v1391 = vsub.s32 0, %v1390
    %v1392 = vrot.slane %v1214, %v1391
    %v1393 = vlaneseq
    %v1394 = vshrl.u32 %v1393, 7
    %v1395 = vsub.s32 0, %v1394
    %v1396 = vrot.slane %v1238, %v1395
    %v1397 = vlaneseq
    %v1398 = vshrl.u32 %v1397, 7
    %v1399 = vsub.s32 0, %v1398
    %v1400 = vrot.slane %v1252, %v1399
    %v1401 = vlaneseq
    %v1402 = vshrl.u32 %v1401, 7
    %v1403 = vsub.s32 0, %v1402
    %v1404 = vrot.slane %v1260, %v1403
    %v1405 = vlaneseq
    %v1406 = vshrl.u32 %v1405, 7
    %v1407 = vsub.s32 0, %v1406
    %v1408 = vrot.slane %v1262, %v1407
    %v1409 = vlaneseq
    %v1410 = vshrl.u32 %v1409, 7
    %v1411 = vsub.s32 0, %v1410
    %v1412 = vrot.slane %v1245, %v1411
    %v1413 = vlaneseq
    %v1414 = vshrl.u32 %v1413, 7
    %v1415 = vsub.s32 0, %v1414
    %v1416 = vrot.slane %v1259, %v1415
    %v1417 = vlaneseq
    %v1418 = vshrl.u32 %v1417, 7
    %v1419 = vsub.s32 0, %v1418
    %v1420 = vrot.slane %v1261, %v1419
    %v1421 = vlaneseq
    %v1422 = vshrl.u32 %v1421, 7
    %v1423 = vsub.s32 0, %v1422
    %v1424 = vrot.slane %v1263, %v1423
    %v1465 = vadd.f32 %v1268, %v1264
    %v1466 = vadd.f32 %v1272, %v1264
    %v1467 = vadd.f32 %v1276, %v1264
    %v1468 = vadd.f32 %v1280, %v1264
    %v1469 = vadd.f32 %v1284, %v1264
    %v1470 = vadd.f32 %v1288, %v1264
    %v1471 = vadd.f32 %v1292, %v1264
    %v1472 = vadd.f32 %v1296, %v1264
    %v1473 = vadd.f32 %v1300, %v1264
    %v1474 = vadd.f32 %v1304, %v1264
    %v1475 = vadd.f32 %v1308, %v1264
    %v1476 = vadd.f32 %v1312, %v1264
    %v1477 = vadd.f32 %v1316, %v1264
    %v1478 = vadd.f32 %v1320, %v1264
    %v1479 = vadd.f32 %v1324, %v1264
    %v1480 = vadd.f32 %v1328, %v1264
    %v1481 = vadd.f32 %v1332, %v1264
    %v1482 = vadd.f32 %v1336, %v1264
    %v1483 = vadd.f32 %v1340, %v1264
    %v1484 = vadd.f32 %v1344, %v1264
    %v1485 = vadd.f32 %v1348, %v1264
    %v1486 = vadd.f32 %v1352, %v1264
    %v1487 = vadd.f32 %v1356, %v1264
    %v1488 = vadd.f32 %v1360, %v1264
    %v1489 = vadd.f32 %v1364, %v1264
    %v1490 = vadd.f32 %v1368, %v1264
    %v1491 = vadd.f32 %v1372, %v1264
    %v1492 = vadd.f32 %v1376, %v1264
    %v1493 = vadd.f32 %v1380, %v1264
    %v1494 = vadd.f32 %v1384, %v1264
    %v1495 = vadd.f32 %v1388, %v1264
    %v1496 = vadd.f32 %v1392, %v1264
    %v1497 = vadd.f32 %v1396, %v1264
    %v1498 = vadd.f32 %v1400, %v1264
    %v1499 = vadd.f32 %v1404, %v1264
    %v1500 = vadd.f32 %v1408, %v1264
    %v1501 = vadd.f32 %v1412, %v1264
    %v1502 = vadd.f32 %v1416, %v1264
    %v1503 = vadd.f32 %v1420, %v1264
    %v1504 = vadd.f32 %v1424, %v1264
    %v1505 = vmax.f32 %v1465, 0.0
    %v1506 = vmax.f32 %v1466, 0.0
    %v1507 = vmax.f32 %v1467, 0.0
    %v1508 = vmax.f32 %v1468, 0.0
    %v1509 = vmax.f32 %v1469, 0.0
    %v1510 = vmax.f32 %v1470, 0.0
    %v1511 = vmax.f32 %v1471, 0.0
    %v1512 = vmax.f32 %v1472, 0.0
    %v1513 = vmax.f32 %v1473, 0.0
    %v1514 = vmax.f32 %v1474, 0.0
    %v1515 = vmax.f32 %v1475, 0.0
    %v1516 = vmax.f32 %v1476, 0.0
    %v1517 = vmax.f32 %v1477, 0.0
    %v1518 = vmax.f32 %v1478, 0.0
    %v1519 = vmax.f32 %v1479, 0.0
    %v1520 = vmax.f32 %v1480, 0.0
    %v1521 = vmax.f32 %v1481, 0.0
    %v1522 = vmax.f32 %v1482, 0.0
    %v1523 = vmax.f32 %v1483, 0.0
    %v1524 = vmax.f32 %v1484, 0.0
    %v1525 = vmax.f32 %v1485, 0.0
    %v1526 = vmax.f32 %v1486, 0.0
    %v1527 = vmax.f32 %v1487, 0.0
    %v1528 = vmax.f32 %v1488, 0.0
    %v1529 = vmax.f32 %v1489, 0.0
    %v1530 = vmax.f32 %v1490, 0.0
    %v1531 = vmax.f32 %v1491, 0.0
    %v1532 = vmax.f32 %v1492, 0.0
    %v1533 = vmax.f32 %v1493, 0.0
    %v1534 = vmax.f32 %v1494, 0.0
    %v1535 = vmax.f32 %v1495, 0.0
    %v1536 = vmax.f32 %v1496, 0.0
    %v1537 = vmax.f32 %v1497, 0.0
    %v1538 = vmax.f32 %v1498, 0.0
    %v1539 = vmax.f32 %v1499, 0.0
    %v1540 = vmax.f32 %v1500, 0.0
    %v1541 = vmax.f32 %v1501, 0.0
    %v1542 = vmax.f32 %v1502, 0.0
    %v1543 = vmax.f32 %v1503, 0.0
    %v1544 = vmax.f32 %v1504, 0.0
    %v1545 = vld [vmem:[%s3] sm:$0xff]
    %v1546 = vld [vmem:[%s3 + $0x8] sm:$0xff]
    %v1547 = vld [vmem:[%s3 + $0x10] sm:$0xff]
    %v1548 = vld [vmem:[%s3 + $0x18] sm:$0xff]
    %v1549 = vld [vmem:[%s3 + $0x20] sm:$0xff]
    %v1550 = vld [vmem:[%s3 + $0x28] sm:$0xff]
    %v1551 = vld [vmem:[%s3 + $0x30] sm:$0xff]
    %v1552 = vld [vmem:[%s3 + $0x38] sm:$0xff]
    %v1553 = vld [vmem:[%s3 + $0x40] sm:$0xff]
    %v1554 = vld [vmem:[%s3 + $0x48] sm:$0xff]
    %v1555 = vld [vmem:[%s3 + $0x50] sm:$0xff]
    %v1556 = vld [vmem:[%s3 + $0x58] sm:$0xff]
    %v1557 = vld [vmem:[%s3 + $0x60] sm:$0xff]
    %v1558 = vld [vmem:[%s3 + $0x68] sm:$0xff]
    %v1559 = vld [vmem:[%s3 + $0x70] sm:$0xff]
    %v1560 = vld [vmem:[%s3 + $0x78] sm:$0xff]
    %v1561 = vld [vmem:[%s4] sm:$0x1]
    %v1563 = vlaneseq
    %v1564 = vshrl.u32 %v1563, 7
    %v1565 = vsub.s32 0, %v1564
    %v1566 = vrot.slane %v1561, %v1565
    %1568 = vmatprep.subr.mxu0 0.0
    %1569 = vmatpush1.msra.mxu0 %v1545
    %1570 = vmatprep.subr.mxu0 0.0
    %1571 = vmatpush1.msra.mxu0 %v1546
    %1572 = vmatprep.subr.mxu0 0.0
    %1573 = vmatpush1.msra.mxu0 %v1547
    %1574 = vmatprep.subr.mxu0 0.0
    %1575 = vmatpush1.msra.mxu0 %v1548
    %1576 = vmatprep.subr.mxu0 0.0
    %1577 = vmatpush1.msra.mxu0 %v1549
    %1578 = vmatprep.subr.mxu0 0.0
    %1579 = vmatpush1.msra.mxu0 %v1550
    %1580 = vmatprep.subr.mxu0 0.0
    %1581 = vmatpush1.msra.mxu0 %v1551
    %1582 = vmatprep.subr.mxu0 0.0
    %1583 = vmatpush1.msra.mxu0 %v1552
    %1584 = vmatprep.subr.mxu0 0.0
    %1585 = vmatpush1.msra.mxu0 %v1553
    %1586 = vmatprep.subr.mxu0 0.0
    %1587 = vmatpush1.msra.mxu0 %v1554
    %1588 = vmatprep.subr.mxu0 0.0
    %1589 = vmatpush1.msra.mxu0 %v1555
    %1590 = vmatprep.subr.mxu0 0.0
    %1591 = vmatpush1.msra.mxu0 %v1556
    %1592 = vmatprep.subr.mxu0 0.0
    %1593 = vmatpush1.msra.mxu0 %v1557
    %1594 = vmatprep.subr.mxu0 0.0
    %1595 = vmatpush1.msra.mxu0 %v1558
    %1596 = vmatprep.subr.mxu0 0.0
    %1597 = vmatpush1.msra.mxu0 %v1559
    %1598 = vmatprep.subr.mxu0 0.0
    %1599 = vmatpush1.msra.mxu0 %v1560
    %1600 = vmatprep.subr.mxu0 0.0
    %1601 = vmatpush1.msra.mxu0 0.0
    %1602 = vmatprep.subr.mxu0 0.0
    %1603 = vmatpush1.msra.mxu0 0.0
    %1604 = vmatprep.subr.mxu0 0.0
    %1605 = vmatpush1.msra.mxu0 0.0
    %1606 = vmatprep.subr.mxu0 0.0
    %1607 = vmatpush1.msra.mxu0 0.0
    %1608 = vmatprep.subr.mxu0 0.0
    %1609 = vmatpush1.msra.mxu0 0.0
    %1610 = vmatprep.subr.mxu0 0.0
    %1611 = vmatpush1.msra.mxu0 0.0
    %1612 = vmatprep.subr.mxu0 0.0
    %1613 = vmatpush1.msra.mxu0 0.0
    %1614 = vmatprep.subr.mxu0 0.0
    %1615 = vmatpush1.msra.mxu0 0.0
    %1616 = vmatprep.subr.mxu0 0.0
    %1617 = vmatpush1.msra.mxu0 0.0
    %1618 = vmatprep.subr.mxu0 0.0
    %1619 = vmatpush1.msra.mxu0 0.0
    %1620 = vmatprep.subr.mxu0 0.0
    %1621 = vmatpush1.msra.mxu0 0.0
    %1622 = vmatprep.subr.mxu0 0.0
    %1623 = vmatpush1.msra.mxu0 0.0
    %1624 = vmatprep.subr.mxu0 0.0
    %1625 = vmatpush1.msra.mxu0 0.0
    %1626 = vmatprep.subr.mxu0 0.0
    %1627 = vmatpush1.msra.mxu0 0.0
    %1628 = vmatprep.subr.mxu0 0.0
    %1629 = vmatpush1.msra.mxu0 0.0
    %1630 = vmatprep.subr.mxu0 0.0
    %1631 = vmatpush1.msra.mxu0 0.0
    %1632 = vmatprep.mubr.f32.mxu0 0.0
    %1633 = vmatmul.mubr.f32.gmra.mrb[0].mxu0 %v1505
    %v1634 = vpop.f32.mrb[0].mxu0
    %v1635 = vadd.f32 %v1566, %v1634
    %v1636 = vpop.f32.mrb[0].mxu0
    %1637 = vmatprep.mubr.f32.mxu0 0.0
    %1638 = vmatmul.mubr.f32.gmra.mrb[0].mxu0 %v1506
    %v1639 = vpop.f32.mrb[0].mxu0
    %v1640 = vadd.f32 %v1566, %v1639
    %v1641 = vpop.f32.mrb[0].mxu0
    %1642 = vmatprep.mubr.f32.mxu0 0.0
    %1643 = vmatmul.mubr.f32.gmra.mrb[0].mxu0 %v1507
    %v1644 = vpop.f32.mrb[0].mxu0
    %v1645 = vadd.f32 %v1566, %v1644
    %v1646 = vpop.f32.mrb[0].mxu0
    %1647 = vmatprep.mubr.f32.mxu0 0.0
    %1648 = vmatmul.mubr.f32.gmra.mrb[0].mxu0 %v1508
    %v1649 = vpop.f32.mrb[0].mxu0
    %v1650 = vadd.f32 %v1566, %v1649
    %v1651 = vpop.f32.mrb[0].mxu0
    %1652 = vmatprep.mubr.f32.mxu0 0.0
    %1653 = vmatmul.mubr.f32.gmra.mrb[0].mxu0 %v1509
    %v1654 = vpop.f32.mrb[0].mxu0
    %v1655 = vadd.f32 %v1566, %v1654
    %v1656 = vpop.f32.mrb[0].mxu0
    %1657 = vmatprep.mubr.f32.mxu0 0.0
    %1658 = vmatmul.mubr.f32.gmra.mrb[0].mxu0 %v1510
    %v1659 = vpop.f32.mrb[0].mxu0
    %v1660 = vadd.f32 %v1566, %v1659
    %v1661 = vpop.f32.mrb[0].mxu0
    %1662 = vmatprep.mubr.f32.mxu0 0.0
    %1663 = vmatmul.mubr.f32.gmra.mrb[0].mxu0 %v1511
    %v1664 = vpop.f32.mrb[0].mxu0
    %v1665 = vadd.f32 %v1566, %v1664
    %v1666 = vpop.f32.mrb[0].mxu0
    %1667 = vmatprep.mubr.f32.mxu0 0.0
    %1668 = vmatmul.mubr.f32.gmra.mrb[0].mxu0 %v1512
    %v1669 = vpop.f32.mrb[0].mxu0
    %v1670 = vadd.f32 %v1566, %v1669
    %v1671 = vpop.f32.mrb[0].mxu0
    %1672 = vmatprep.mubr.f32.mxu0 0.0
    %1673 = vmatmul.mubr.f32.gmra.mrb[0].mxu0 %v1513
    %v1674 = vpop.f32.mrb[0].mxu0
    %v1675 = vadd.f32 %v1566, %v1674
    %v1676 = vpop.f32.mrb[0].mxu0
    %1677 = vmatprep.mubr.f32.mxu0 0.0
    %1678 = vmatmul.mubr.f32.gmra.mrb[0].mxu0 %v1514
    %v1679 = vpop.f32.mrb[0].mxu0
    %v1680 = vadd.f32 %v1566, %v1679
    %v1681 = vpop.f32.mrb[0].mxu0
    %1682 = vmatprep.mubr.f32.mxu0 0.0
    %1683 = vmatmul.mubr.f32.gmra.mrb[0].mxu0 %v1515
    %v1684 = vpop.f32.mrb[0].mxu0
    %v1685 = vadd.f32 %v1566, %v1684
    %v1686 = vpop.f32.mrb[0].mxu0
    %1687 = vmatprep.mubr.f32.mxu0 0.0
    %1688 = vmatmul.mubr.f32.gmra.mrb[0].mxu0 %v1516
    %v1689 = vpop.f32.mrb[0].mxu0
    %v1690 = vadd.f32 %v1566, %v1689
    %v1691 = vpop.f32.mrb[0].mxu0
    %1692 = vmatprep.mubr.f32.mxu0 0.0
    %1693 = vmatmul.mubr.f32.gmra.mrb[0].mxu0 %v1517
    %v1694 = vpop.f32.mrb[0].mxu0
    %v1695 = vadd.f32 %v1566, %v1694
    %v1696 = vpop.f32.mrb[0].mxu0
    %1697 = vmatprep.mubr.f32.mxu0 0.0
    %1698 = vmatmul.mubr.f32.gmra.mrb[0].mxu0 %v1518
    %v1699 = vpop.f32.mrb[0].mxu0
    %v1700 = vadd.f32 %v1566, %v1699
    %v1701 = vpop.f32.mrb[0].mxu0
    %1702 = vmatprep.mubr.f32.mxu0 0.0
    %1703 = vmatmul.mubr.f32.gmra.mrb[0].mxu0 %v1519
    %v1704 = vpop.f32.mrb[0].mxu0
    %v1705 = vadd.f32 %v1566, %v1704
    %v1706 = vpop.f32.mrb[0].mxu0
    %1707 = vmatprep.mubr.f32.mxu0 0.0
    %1708 = vmatmul.mubr.f32.gmra.mrb[0].mxu0 %v1520
    %v1709 = vpop.f32.mrb[0].mxu0
    %v1710 = vadd.f32 %v1566, %v1709
    %v1711 = vpop.f32.mrb[0].mxu0
    %1712 = vmatprep.mubr.f32.mxu0 0.0
    %1713 = vmatmul.mubr.f32.gmra.mrb[0].mxu0 %v1521
    %v1714 = vpop.f32.mrb[0].mxu0
    %v1715 = vadd.f32 %v1566, %v1714
    %v1716 = vpop.f32.mrb[0].mxu0
    %1717 = vmatprep.mubr.f32.mxu0 0.0
    %1718 = vmatmul.mubr.f32.gmra.mrb[0].mxu0 %v1522
    %v1719 = vpop.f32.mrb[0].mxu0
    %v1720 = vadd.f32 %v1566, %v1719
    %v1721 = vpop.f32.mrb[0].mxu0
    %1722 = vmatprep.mubr.f32.mxu0 0.0
    %1723 = vmatmul.mubr.f32.gmra.mrb[0].mxu0 %v1523
    %v1724 = vpop.f32.mrb[0].mxu0
    %v1725 = vadd.f32 %v1566, %v1724
    %v1726 = vpop.f32.mrb[0].mxu0
    %1727 = vmatprep.mubr.f32.mxu0 0.0
    %1728 = vmatmul.mubr.f32.gmra.mrb[0].mxu0 %v1524
    %v1729 = vpop.f32.mrb[0].mxu0
    %v1730 = vadd.f32 %v1566, %v1729
    %v1731 = vpop.f32.mrb[0].mxu0
    %1732 = vmatprep.mubr.f32.mxu0 0.0
    %1733 = vmatmul.mubr.f32.gmra.mrb[0].mxu0 %v1525
    %v1734 = vpop.f32.mrb[0].mxu0
    %v1735 = vadd.f32 %v1566, %v1734
    %v1736 = vpop.f32.mrb[0].mxu0
    %1737 = vmatprep.mubr.f32.mxu0 0.0
    %1738 = vmatmul.mubr.f32.gmra.mrb[0].mxu0 %v1526
    %v1739 = vpop.f32.mrb[0].mxu0
    %v1740 = vadd.f32 %v1566, %v1739
    %v1741 = vpop.f32.mrb[0].mxu0
    %1742 = vmatprep.mubr.f32.mxu0 0.0
    %1743 = vmatmul.mubr.f32.gmra.mrb[0].mxu0 %v1527
    %v1744 = vpop.f32.mrb[0].mxu0
    %v1745 = vadd.f32 %v1566, %v1744
    %v1746 = vpop.f32.mrb[0].mxu0
    %1747 = vmatprep.mubr.f32.mxu0 0.0
    %1748 = vmatmul.mubr.f32.gmra.mrb[0].mxu0 %v1528
    %v1749 = vpop.f32.mrb[0].mxu0
    %v1750 = vadd.f32 %v1566, %v1749
    %v1751 = vpop.f32.mrb[0].mxu0
    %1752 = vmatprep.mubr.f32.mxu0 0.0
    %1753 = vmatmul.mubr.f32.gmra.mrb[0].mxu0 %v1529
    %v1754 = vpop.f32.mrb[0].mxu0
    %v1755 = vadd.f32 %v1566, %v1754
    %v1756 = vpop.f32.mrb[0].mxu0
    %1757 = vmatprep.mubr.f32.mxu0 0.0
    %1758 = vmatmul.mubr.f32.gmra.mrb[0].mxu0 %v1530
    %v1759 = vpop.f32.mrb[0].mxu0
    %v1760 = vadd.f32 %v1566, %v1759
    %v1761 = vpop.f32.mrb[0].mxu0
    %1762 = vmatprep.mubr.f32.mxu0 0.0
    %1763 = vmatmul.mubr.f32.gmra.mrb[0].mxu0 %v1531
    %v1764 = vpop.f32.mrb[0].mxu0
    %v1765 = vadd.f32 %v1566, %v1764
    %v1766 = vpop.f32.mrb[0].mxu0
    %1767 = vmatprep.mubr.f32.mxu0 0.0
    %1768 = vmatmul.mubr.f32.gmra.mrb[0].mxu0 %v1532
    %v1769 = vpop.f32.mrb[0].mxu0
    %v1770 = vadd.f32 %v1566, %v1769
    %v1771 = vpop.f32.mrb[0].mxu0
    %1772 = vmatprep.mubr.f32.mxu0 0.0
    %1773 = vmatmul.mubr.f32.gmra.mrb[0].mxu0 %v1533
    %v1774 = vpop.f32.mrb[0].mxu0
    %v1775 = vadd.f32 %v1566, %v1774
    %v1776 = vpop.f32.mrb[0].mxu0
    %1777 = vmatprep.mubr.f32.mxu0 0.0
    %1778 = vmatmul.mubr.f32.gmra.mrb[0].mxu0 %v1534
    %v1779 = vpop.f32.mrb[0].mxu0
    %v1780 = vadd.f32 %v1566, %v1779
    %v1781 = vpop.f32.mrb[0].mxu0
    %1782 = vmatprep.mubr.f32.mxu0 0.0
    %1783 = vmatmul.mubr.f32.gmra.mrb[0].mxu0 %v1535
    %v1784 = vpop.f32.mrb[0].mxu0
    %v1785 = vadd.f32 %v1566, %v1784
    %v1786 = vpop.f32.mrb[0].mxu0
    %1787 = vmatprep.mubr.f32.mxu0 0.0
    %1788 = vmatmul.mubr.f32.gmra.mrb[0].mxu0 %v1536
    %v1789 = vpop.f32.mrb[0].mxu0
    %v1790 = vadd.f32 %v1566, %v1789
    %v1791 = vpop.f32.mrb[0].mxu0
    %1792 = vmatprep.mubr.f32.mxu0 0.0
    %1793 = vmatmul.mubr.f32.gmra.mrb[0].mxu0 %v1537
    %v1794 = vpop.f32.mrb[0].mxu0
    %v1795 = vadd.f32 %v1566, %v1794
    %v1796 = vpop.f32.mrb[0].mxu0
    %1797 = vmatprep.mubr.f32.mxu0 0.0
    %1798 = vmatmul.mubr.f32.gmra.mrb[0].mxu0 %v1538
    %v1799 = vpop.f32.mrb[0].mxu0
    %v1800 = vadd.f32 %v1566, %v1799
    %v1801 = vpop.f32.mrb[0].mxu0
    %1802 = vmatprep.mubr.f32.mxu0 0.0
    %1803 = vmatmul.mubr.f32.gmra.mrb[0].mxu0 %v1539
    %v1804 = vpop.f32.mrb[0].mxu0
    %v1805 = vadd.f32 %v1566, %v1804
    %v1806 = vpop.f32.mrb[0].mxu0
    %1807 = vmatprep.mubr.f32.mxu0 0.0
    %1808 = vmatmul.mubr.f32.gmra.mrb[0].mxu0 %v1540
    %v1809 = vpop.f32.mrb[0].mxu0
    %v1810 = vadd.f32 %v1566, %v1809
    %v1811 = vpop.f32.mrb[0].mxu0
    %1812 = vmatprep.mubr.f32.mxu0 0.0
    %1813 = vmatmul.mubr.f32.gmra.mrb[0].mxu0 %v1541
    %v1814 = vpop.f32.mrb[0].mxu0
    %v1815 = vadd.f32 %v1566, %v1814
    %v1816 = vpop.f32.mrb[0].mxu0
    %1817 = vmatprep.mubr.f32.mxu0 0.0
    %1818 = vmatmul.mubr.f32.gmra.mrb[0].mxu0 %v1542
    %v1819 = vpop.f32.mrb[0].mxu0
    %v1820 = vadd.f32 %v1566, %v1819
    %v1821 = vpop.f32.mrb[0].mxu0
    %1822 = vmatprep.mubr.f32.mxu0 0.0
    %1823 = vmatmul.mubr.f32.gmra.mrb[0].mxu0 %v1543
    %v1824 = vpop.f32.mrb[0].mxu0
    %v1825 = vadd.f32 %v1566, %v1824
    %v1826 = vpop.f32.mrb[0].mxu0
    %1827 = vmatprep.mubr.f32.mxu0 0.0
    %1828 = vmatmul.mubr.f32.gmra.mrb[0].mxu0 %v1544
    %v1829 = vpop.f32.mrb[0].mxu0
    %v1830 = vadd.f32 %v1566, %v1829
    %v1831 = vpop.f32.mrb[0].mxu0
    %1832 = vdwg.mxu0
    %v1833 = vmax.f32 %v1635, 0.0
    %v1834 = vmax.f32 %v1640, 0.0
    %v1835 = vmax.f32 %v1645, 0.0
    %v1836 = vmax.f32 %v1650, 0.0
    %v1837 = vmax.f32 %v1655, 0.0
    %v1838 = vmax.f32 %v1660, 0.0
    %v1839 = vmax.f32 %v1665, 0.0
    %v1840 = vmax.f32 %v1670, 0.0
    %v1841 = vmax.f32 %v1675, 0.0
    %v1842 = vmax.f32 %v1680, 0.0
    %v1843 = vmax.f32 %v1685, 0.0
    %v1844 = vmax.f32 %v1690, 0.0
    %v1845 = vmax.f32 %v1695, 0.0
    %v1846 = vmax.f32 %v1700, 0.0
    %v1847 = vmax.f32 %v1705, 0.0
    %v1848 = vmax.f32 %v1710, 0.0
    %v1849 = vmax.f32 %v1715, 0.0
    %v1850 = vmax.f32 %v1720, 0.0
    %v1851 = vmax.f32 %v1725, 0.0
    %v1852 = vmax.f32 %v1730, 0.0
    %v1853 = vmax.f32 %v1735, 0.0
    %v1854 = vmax.f32 %v1740, 0.0
    %v1855 = vmax.f32 %v1745, 0.0
    %v1856 = vmax.f32 %v1750, 0.0
    %v1857 = vmax.f32 %v1755, 0.0
    %v1858 = vmax.f32 %v1760, 0.0
    %v1859 = vmax.f32 %v1765, 0.0
    %v1860 = vmax.f32 %v1770, 0.0
    %v1861 = vmax.f32 %v1775, 0.0
    %v1862 = vmax.f32 %v1780, 0.0
    %v1863 = vmax.f32 %v1785, 0.0
    %v1864 = vmax.f32 %v1790, 0.0
    %v1865 = vmax.f32 %v1795, 0.0
    %v1866 = vmax.f32 %v1800, 0.0
    %v1867 = vmax.f32 %v1805, 0.0
    %v1868 = vmax.f32 %v1810, 0.0
    %v1869 = vmax.f32 %v1815, 0.0
    %v1870 = vmax.f32 %v1820, 0.0
    %v1871 = vmax.f32 %v1825, 0.0
    %v1872 = vmax.f32 %v1830, 0.0
    %v1873 = vld [vmem:[%s5] sm:$0xff]
    %v1874 = vld [vmem:[%s5 + $0x8] sm:$0xff]
    %v1875 = vld [vmem:[%s5 + $0x10] sm:$0xff]
    %v1876 = vld [vmem:[%s5 + $0x18] sm:$0xff]
    %v1877 = vld [vmem:[%s5 + $0x20] sm:$0xff]
    %v1878 = vld [vmem:[%s5 + $0x28] sm:$0xff]
    %v1879 = vld [vmem:[%s5 + $0x30] sm:$0xff]
    %v1880 = vld [vmem:[%s5 + $0x38] sm:$0xff]
    %v1881 = vld [vmem:[%s5 + $0x40] sm:$0xff]
    %v1882 = vld [vmem:[%s5 + $0x48] sm:$0xff]
    %v1883 = vld [vmem:[%s5 + $0x50] sm:$0xff]
    %v1884 = vld [vmem:[%s5 + $0x58] sm:$0xff]
    %v1885 = vld [vmem:[%s5 + $0x60] sm:$0xff]
    %v1886 = vld [vmem:[%s5 + $0x68] sm:$0xff]
    %v1887 = vld [vmem:[%s5 + $0x70] sm:$0xff]
    %v1888 = vld [vmem:[%s5 + $0x78] sm:$0xff]
    %v1889 = vld [vmem:[%s6] sm:$0x1]
    %v1891 = vlaneseq
    %v1892 = vshrl.u32 %v1891, 7
    %v1893 = vsub.s32 0, %v1892
    %v1894 = vrot.slane %v1889, %v1893
    %1896 = vmatprep.subr.mxu0 0.0
    %1897 = vmatpush1.msra.mxu0 %v1873
    %1898 = vmatprep.subr.mxu0 0.0
    %1899 = vmatpush1.msra.mxu0 %v1874
    %1900 = vmatprep.subr.mxu0 0.0
    %1901 = vmatpush1.msra.mxu0 %v1875
    %1902 = vmatprep.subr.mxu0 0.0
    %1903 = vmatpush1.msra.mxu0 %v1876
    %1904 = vmatprep.subr.mxu0 0.0
    %1905 = vmatpush1.msra.mxu0 %v1877
    %1906 = vmatprep.subr.mxu0 0.0
    %1907 = vmatpush1.msra.mxu0 %v1878
    %1908 = vmatprep.subr.mxu0 0.0
    %1909 = vmatpush1.msra.mxu0 %v1879
    %1910 = vmatprep.subr.mxu0 0.0
    %1911 = vmatpush1.msra.mxu0 %v1880
    %1912 = vmatprep.subr.mxu0 0.0
    %1913 = vmatpush1.msra.mxu0 %v1881
    %1914 = vmatprep.subr.mxu0 0.0
    %1915 = vmatpush1.msra.mxu0 %v1882
    %1916 = vmatprep.subr.mxu0 0.0
    %1917 = vmatpush1.msra.mxu0 %v1883
    %1918 = vmatprep.subr.mxu0 0.0
    %1919 = vmatpush1.msra.mxu0 %v1884
    %1920 = vmatprep.subr.mxu0 0.0
    %1921 = vmatpush1.msra.mxu0 %v1885
    %1922 = vmatprep.subr.mxu0 0.0
    %1923 = vmatpush1.msra.mxu0 %v1886
    %1924 = vmatprep.subr.mxu0 0.0
    %1925 = vmatpush1.msra.mxu0 %v1887
    %1926 = vmatprep.subr.mxu0 0.0
    %1927 = vmatpush1.msra.mxu0 %v1888
    %1928 = vmatprep.subr.mxu0 0.0
    %1929 = vmatpush1.msra.mxu0 0.0
    %1930 = vmatprep.subr.mxu0 0.0
    %1931 = vmatpush1.msra.mxu0 0.0
    %1932 = vmatprep.subr.mxu0 0.0
    %1933 = vmatpush1.msra.mxu0 0.0
    %1934 = vmatprep.subr.mxu0 0.0
    %1935 = vmatpush1.msra.mxu0 0.0
    %1936 = vmatprep.subr.mxu0 0.0
    %1937 = vmatpush1.msra.mxu0 0.0
    %1938 = vmatprep.subr.mxu0 0.0
    %1939 = vmatpush1.msra.mxu0 0.0
    %1940 = vmatprep.subr.mxu0 0.0
    %1941 = vmatpush1.msra.mxu0 0.0
    %1942 = vmatprep.subr.mxu0 0.0
    %1943 = vmatpush1.msra.mxu0 0.0
    %1944 = vmatprep.subr.mxu0 0.0
    %1945 = vmatpush1.msra.mxu0 0.0
    %1946 = vmatprep.subr.mxu0 0.0
    %1947 = vmatpush1.msra.mxu0 0.0
    %1948 = vmatprep.subr.mxu0 0.0
    %1949 = vmatpush1.msra.mxu0 0.0
    %1950 = vmatprep.subr.mxu0 0.0
    %1951 = vmatpush1.msra.mxu0 0.0
    %1952 = vmatprep.subr.mxu0 0.0
    %1953 = vmatpush1.msra.mxu0 0.0
    %1954 = vmatprep.subr.mxu0 0.0
    %1955 = vmatpush1.msra.mxu0 0.0
    %1956 = vmatprep.subr.mxu0 0.0
    %1957 = vmatpush1.msra.mxu0 0.0
    %1958 = vmatprep.subr.mxu0 0.0
    %1959 = vmatpush1.msra.mxu0 0.0
    %1960 = vmatprep.mubr.f32.mxu0 0.0
    %1961 = vmatmul.mubr.f32.gmra.mrb[0].mxu0 %v1833
    %v1962 = vpop.f32.mrb[0].mxu0
    %v1963 = vadd.f32 %v1894, %v1962
    %v1964 = vpop.f32.mrb[0].mxu0
    %1965 = vmatprep.mubr.f32.mxu0 0.0
    %1966 = vmatmul.mubr.f32.gmra.mrb[0].mxu0 %v1834
    %v1967 = vpop.f32.mrb[0].mxu0
    %v1968 = vadd.f32 %v1894, %v1967
    %v1969 = vpop.f32.mrb[0].mxu0
    %1970 = vmatprep.mubr.f32.mxu0 0.0
    %1971 = vmatmul.mubr.f32.gmra.mrb[0].mxu0 %v1835
    %v1972 = vpop.f32.mrb[0].mxu0
    %v1973 = vadd.f32 %v1894, %v1972
    %v1974 = vpop.f32.mrb[0].mxu0
    %1975 = vmatprep.mubr.f32.mxu0 0.0
    %1976 = vmatmul.mubr.f32.gmra.mrb[0].mxu0 %v1836
    %v1977 = vpop.f32.mrb[0].mxu0
    %v1978 = vadd.f32 %v1894, %v1977
    %v1979 = vpop.f32.mrb[0].mxu0
    %1980 = vmatprep.mubr.f32.mxu0 0.0
    %1981 = vmatmul.mubr.f32.gmra.mrb[0].mxu0 %v1837
    %v1982 = vpop.f32.mrb[0].mxu0
    %v1983 = vadd.f32 %v1894, %v1982
    %v1984 = vpop.f32.mrb[0].mxu0
    %1985 = vmatprep.mubr.f32.mxu0 0.0
    %1986 = vmatmul.mubr.f32.gmra.mrb[0].mxu0 %v1838
    %v1987 = vpop.f32.mrb[0].mxu0
    %v1988 = vadd.f32 %v1894, %v1987
    %v1989 = vpop.f32.mrb[0].mxu0
    %1990 = vmatprep.mubr.f32.mxu0 0.0
    %1991 = vmatmul.mubr.f32.gmra.mrb[0].mxu0 %v1839
    %v1992 = vpop.f32.mrb[0].mxu0
    %v1993 = vadd.f32 %v1894, %v1992
    %v1994 = vpop.f32.mrb[0].mxu0
    %1995 = vmatprep.mubr.f32.mxu0 0.0
    %1996 = vmatmul.mubr.f32.gmra.mrb[0].mxu0 %v1840
    %v1997 = vpop.f32.mrb[0].mxu0
    %v1998 = vadd.f32 %v1894, %v1997
    %v1999 = vpop.f32.mrb[0].mxu0
    %2000 = vmatprep.mubr.f32.mxu0 0.0
    %2001 = vmatmul.mubr.f32.gmra.mrb[0].mxu0 %v1841
    %v2002 = vpop.f32.mrb[0].mxu0
    %v2003 = vadd.f32 %v1894, %v2002
    %v2004 = vpop.f32.mrb[0].mxu0
    %2005 = vmatprep.mubr.f32.mxu0 0.0
    %2006 = vmatmul.mubr.f32.gmra.mrb[0].mxu0 %v1842
    %v2007 = vpop.f32.mrb[0].mxu0
    %v2008 = vadd.f32 %v1894, %v2007
    %v2009 = vpop.f32.mrb[0].mxu0
    %2010 = vmatprep.mubr.f32.mxu0 0.0
    %2011 = vmatmul.mubr.f32.gmra.mrb[0].mxu0 %v1843
    %v2012 = vpop.f32.mrb[0].mxu0
    %v2013 = vadd.f32 %v1894, %v2012
    %v2014 = vpop.f32.mrb[0].mxu0
    %2015 = vmatprep.mubr.f32.mxu0 0.0
    %2016 = vmatmul.mubr.f32.gmra.mrb[0].mxu0 %v1844
    %v2017 = vpop.f32.mrb[0].mxu0
    %v2018 = vadd.f32 %v1894, %v2017
    %v2019 = vpop.f32.mrb[0].mxu0
    %2020 = vmatprep.mubr.f32.mxu0 0.0
    %2021 = vmatmul.mubr.f32.gmra.mrb[0].mxu0 %v1845
    %v2022 = vpop.f32.mrb[0].mxu0
    %v2023 = vadd.f32 %v1894, %v2022
    %v2024 = vpop.f32.mrb[0].mxu0
    %2025 = vmatprep.mubr.f32.mxu0 0.0
    %2026 = vmatmul.mubr.f32.gmra.mrb[0].mxu0 %v1846
    %v2027 = vpop.f32.mrb[0].mxu0
    %v2028 = vadd.f32 %v1894, %v2027
    %v2029 = vpop.f32.mrb[0].mxu0
    %2030 = vmatprep.mubr.f32.mxu0 0.0
    %2031 = vmatmul.mubr.f32.gmra.mrb[0].mxu0 %v1847
    %v2032 = vpop.f32.mrb[0].mxu0
    %v2033 = vadd.f32 %v1894, %v2032
    %v2034 = vpop.f32.mrb[0].mxu0
    %2035 = vmatprep.mubr.f32.mxu0 0.0
    %2036 = vmatmul.mubr.f32.gmra.mrb[0].mxu0 %v1848
    %v2037 = vpop.f32.mrb[0].mxu0
    %v2038 = vadd.f32 %v1894, %v2037
    %v2039 = vpop.f32.mrb[0].mxu0
    %2040 = vmatprep.mubr.f32.mxu0 0.0
    %2041 = vmatmul.mubr.f32.gmra.mrb[0].mxu0 %v1849
    %v2042 = vpop.f32.mrb[0].mxu0
    %v2043 = vadd.f32 %v1894, %v2042
    %v2044 = vpop.f32.mrb[0].mxu0
    %2045 = vmatprep.mubr.f32.mxu0 0.0
    %2046 = vmatmul.mubr.f32.gmra.mrb[0].mxu0 %v1850
    %v2047 = vpop.f32.mrb[0].mxu0
    %v2048 = vadd.f32 %v1894, %v2047
    %v2049 = vpop.f32.mrb[0].mxu0
    %2050 = vmatprep.mubr.f32.mxu0 0.0
    %2051 = vmatmul.mubr.f32.gmra.mrb[0].mxu0 %v1851
    %v2052 = vpop.f32.mrb[0].mxu0
    %v2053 = vadd.f32 %v1894, %v2052
    %v2054 = vpop.f32.mrb[0].mxu0
    %2055 = vmatprep.mubr.f32.mxu0 0.0
    %2056 = vmatmul.mubr.f32.gmra.mrb[0].mxu0 %v1852
    %v2057 = vpop.f32.mrb[0].mxu0
    %v2058 = vadd.f32 %v1894, %v2057
    %v2059 = vpop.f32.mrb[0].mxu0
    %2060 = vmatprep.mubr.f32.mxu0 0.0
    %2061 = vmatmul.mubr.f32.gmra.mrb[0].mxu0 %v1853
    %v2062 = vpop.f32.mrb[0].mxu0
    %v2063 = vadd.f32 %v1894, %v2062
    %v2064 = vpop.f32.mrb[0].mxu0
    %2065 = vmatprep.mubr.f32.mxu0 0.0
    %2066 = vmatmul.mubr.f32.gmra.mrb[0].mxu0 %v1854
    %v2067 = vpop.f32.mrb[0].mxu0
    %v2068 = vadd.f32 %v1894, %v2067
    %v2069 = vpop.f32.mrb[0].mxu0
    %2070 = vmatprep.mubr.f32.mxu0 0.0
    %2071 = vmatmul.mubr.f32.gmra.mrb[0].mxu0 %v1855
    %v2072 = vpop.f32.mrb[0].mxu0
    %v2073 = vadd.f32 %v1894, %v2072
    %v2074 = vpop.f32.mrb[0].mxu0
    %2075 = vmatprep.mubr.f32.mxu0 0.0
    %2076 = vmatmul.mubr.f32.gmra.mrb[0].mxu0 %v1856
    %v2077 = vpop.f32.mrb[0].mxu0
    %v2078 = vadd.f32 %v1894, %v2077
    %v2079 = vpop.f32.mrb[0].mxu0
    %2080 = vmatprep.mubr.f32.mxu0 0.0
    %2081 = vmatmul.mubr.f32.gmra.mrb[0].mxu0 %v1857
    %v2082 = vpop.f32.mrb[0].mxu0
    %v2083 = vadd.f32 %v1894, %v2082
    %v2084 = vpop.f32.mrb[0].mxu0
    %2085 = vmatprep.mubr.f32.mxu0 0.0
    %2086 = vmatmul.mubr.f32.gmra.mrb[0].mxu0 %v1858
    %v2087 = vpop.f32.mrb[0].mxu0
    %v2088 = vadd.f32 %v1894, %v2087
    %v2089 = vpop.f32.mrb[0].mxu0
    %2090 = vmatprep.mubr.f32.mxu0 0.0
    %2091 = vmatmul.mubr.f32.gmra.mrb[0].mxu0 %v1859
    %v2092 = vpop.f32.mrb[0].mxu0
    %v2093 = vadd.f32 %v1894, %v2092
    %v2094 = vpop.f32.mrb[0].mxu0
    %2095 = vmatprep.mubr.f32.mxu0 0.0
    %2096 = vmatmul.mubr.f32.gmra.mrb[0].mxu0 %v1860
    %v2097 = vpop.f32.mrb[0].mxu0
    %v2098 = vadd.f32 %v1894, %v2097
    %v2099 = vpop.f32.mrb[0].mxu0
    %2100 = vmatprep.mubr.f32.mxu0 0.0
    %2101 = vmatmul.mubr.f32.gmra.mrb[0].mxu0 %v1861
    %v2102 = vpop.f32.mrb[0].mxu0
    %v2103 = vadd.f32 %v1894, %v2102
    %v2104 = vpop.f32.mrb[0].mxu0
    %2105 = vmatprep.mubr.f32.mxu0 0.0
    %2106 = vmatmul.mubr.f32.gmra.mrb[0].mxu0 %v1862
    %v2107 = vpop.f32.mrb[0].mxu0
    %v2108 = vadd.f32 %v1894, %v2107
    %v2109 = vpop.f32.mrb[0].mxu0
    %2110 = vmatprep.mubr.f32.mxu0 0.0
    %2111 = vmatmul.mubr.f32.gmra.mrb[0].mxu0 %v1863
    %v2112 = vpop.f32.mrb[0].mxu0
    %v2113 = vadd.f32 %v1894, %v2112
    %v2114 = vpop.f32.mrb[0].mxu0
    %2115 = vmatprep.mubr.f32.mxu0 0.0
    %2116 = vmatmul.mubr.f32.gmra.mrb[0].mxu0 %v1864
    %v2117 = vpop.f32.mrb[0].mxu0
    %v2118 = vadd.f32 %v1894, %v2117
    %v2119 = vpop.f32.mrb[0].mxu0
    %2120 = vmatprep.mubr.f32.mxu0 0.0
    %2121 = vmatmul.mubr.f32.gmra.mrb[0].mxu0 %v1865
    %v2122 = vpop.f32.mrb[0].mxu0
    %v2123 = vadd.f32 %v1894, %v2122
    %v2124 = vpop.f32.mrb[0].mxu0
    %2125 = vmatprep.mubr.f32.mxu0 0.0
    %2126 = vmatmul.mubr.f32.gmra.mrb[0].mxu0 %v1866
    %v2127 = vpop.f32.mrb[0].mxu0
    %v2128 = vadd.f32 %v1894, %v2127
    %v2129 = vpop.f32.mrb[0].mxu0
    %2130 = vmatprep.mubr.f32.mxu0 0.0
    %2131 = vmatmul.mubr.f32.gmra.mrb[0].mxu0 %v1867
    %v2132 = vpop.f32.mrb[0].mxu0
    %v2133 = vadd.f32 %v1894, %v2132
    %v2134 = vpop.f32.mrb[0].mxu0
    %2135 = vmatprep.mubr.f32.mxu0 0.0
    %2136 = vmatmul.mubr.f32.gmra.mrb[0].mxu0 %v1868
    %v2137 = vpop.f32.mrb[0].mxu0
    %v2138 = vadd.f32 %v1894, %v2137
    %v2139 = vpop.f32.mrb[0].mxu0
    %2140 = vmatprep.mubr.f32.mxu0 0.0
    %2141 = vmatmul.mubr.f32.gmra.mrb[0].mxu0 %v1869
    %v2142 = vpop.f32.mrb[0].mxu0
    %v2143 = vadd.f32 %v1894, %v2142
    %v2144 = vpop.f32.mrb[0].mxu0
    %2145 = vmatprep.mubr.f32.mxu0 0.0
    %2146 = vmatmul.mubr.f32.gmra.mrb[0].mxu0 %v1870
    %v2147 = vpop.f32.mrb[0].mxu0
    %v2148 = vadd.f32 %v1894, %v2147
    %v2149 = vpop.f32.mrb[0].mxu0
    %2150 = vmatprep.mubr.f32.mxu0 0.0
    %2151 = vmatmul.mubr.f32.gmra.mrb[0].mxu0 %v1871
    %v2152 = vpop.f32.mrb[0].mxu0
    %v2153 = vadd.f32 %v1894, %v2152
    %v2154 = vpop.f32.mrb[0].mxu0
    %2155 = vmatprep.mubr.f32.mxu0 0.0
    %2156 = vmatmul.mubr.f32.gmra.mrb[0].mxu0 %v1872
    %v2157 = vpop.f32.mrb[0].mxu0
    %v2158 = vadd.f32 %v1894, %v2157
    %v2159 = vpop.f32.mrb[0].mxu0
    %2160 = vdwg.mxu0
    %v2161 = vxor.u32 %v1963, 2147483648
    %v2162 = vxor.u32 %v1968, 2147483648
    %v2163 = vxor.u32 %v1973, 2147483648
    %v2164 = vxor.u32 %v1978, 2147483648
    %v2165 = vxor.u32 %v1983, 2147483648
    %v2166 = vxor.u32 %v1988, 2147483648
    %v2167 = vxor.u32 %v1993, 2147483648
    %v2168 = vxor.u32 %v1998, 2147483648
    %v2169 = vxor.u32 %v2003, 2147483648
    %v2170 = vxor.u32 %v2008, 2147483648
    %v2171 = vxor.u32 %v2013, 2147483648
    %v2172 = vxor.u32 %v2018, 2147483648
    %v2173 = vxor.u32 %v2023, 2147483648
    %v2174 = vxor.u32 %v2028, 2147483648
    %v2175 = vxor.u32 %v2033, 2147483648
    %v2176 = vxor.u32 %v2038, 2147483648
    %v2177 = vxor.u32 %v2043, 2147483648
    %v2178 = vxor.u32 %v2048, 2147483648
    %v2179 = vxor.u32 %v2053, 2147483648
    %v2180 = vxor.u32 %v2058, 2147483648
    %v2181 = vxor.u32 %v2063, 2147483648
    %v2182 = vxor.u32 %v2068, 2147483648
    %v2183 = vxor.u32 %v2073, 2147483648
    %v2184 = vxor.u32 %v2078, 2147483648
    %v2185 = vxor.u32 %v2083, 2147483648
    %v2186 = vxor.u32 %v2088, 2147483648
    %v2187 = vxor.u32 %v2093, 2147483648
    %v2188 = vxor.u32 %v2098, 2147483648
    %v2189 = vxor.u32 %v2103, 2147483648
    %v2190 = vxor.u32 %v2108, 2147483648
    %v2191 = vxor.u32 %v2113, 2147483648
    %v2192 = vxor.u32 %v2118, 2147483648
    %v2193 = vxor.u32 %v2123, 2147483648
    %v2194 = vxor.u32 %v2128, 2147483648
    %v2195 = vxor.u32 %v2133, 2147483648
    %v2196 = vxor.u32 %v2138, 2147483648
    %v2197 = vxor.u32 %v2143, 2147483648
    %v2198 = vxor.u32 %v2148, 2147483648
    %v2199 = vxor.u32 %v2153, 2147483648
    %v2200 = vxor.u32 %v2158, 2147483648
    %v2201 = vmul.f32 %v2161, 1.442695
    %v2202 = vpow.pop %v2201
    %v2203 = vmul.f32 %v2162, 1.442695
    %v2204 = vpow.pop %v2203
    %v2205 = vmul.f32 %v2163, 1.442695
    %v2206 = vpow.pop %v2205
    %v2207 = vmul.f32 %v2164, 1.442695
    %v2208 = vpow.pop %v2207
    %v2209 = vmul.f32 %v2165, 1.442695
    %v2210 = vpow.pop %v2209
    %v2211 = vmul.f32 %v2166, 1.442695
    %v2212 = vpow.pop %v2211
    %v2213 = vmul.f32 %v2167, 1.442695
    %v2214 = vpow.pop %v2213
    %v2215 = vmul.f32 %v2168, 1.442695
    %v2216 = vpow.pop %v2215
    %v2217 = vmul.f32 %v2169, 1.442695
    %v2218 = vpow.pop %v2217
    %v2219 = vmul.f32 %v2170, 1.442695
    %v2220 = vpow.pop %v2219
    %v2221 = vmul.f32 %v2171, 1.442695
    %v2222 = vpow.pop %v2221
    %v2223 = vmul.f32 %v2172, 1.442695
    %v2224 = vpow.pop %v2223
    %v2225 = vmul.f32 %v2173, 1.442695
    %v2226 = vpow.pop %v2225
    %v2227 = vmul.f32 %v2174, 1.442695
    %v2228 = vpow.pop %v2227
    %v2229 = vmul.f32 %v2175, 1.442695
    %v2230 = vpow.pop %v2229
    %v2231 = vmul.f32 %v2176, 1.442695
    %v2232 = vpow.pop %v2231
    %v2233 = vmul.f32 %v2177, 1.442695
    %v2234 = vpow.pop %v2233
    %v2235 = vmul.f32 %v2178, 1.442695
    %v2236 = vpow.pop %v2235
    %v2237 = vmul.f32 %v2179, 1.442695
    %v2238 = vpow.pop %v2237
    %v2239 = vmul.f32 %v2180, 1.442695
    %v2240 = vpow.pop %v2239
    %v2241 = vmul.f32 %v2181, 1.442695
    %v2242 = vpow.pop %v2241
    %v2243 = vmul.f32 %v2182, 1.442695
    %v2244 = vpow.pop %v2243
    %v2245 = vmul.f32 %v2183, 1.442695
    %v2246 = vpow.pop %v2245
    %v2247 = vmul.f32 %v2184, 1.442695
    %v2248 = vpow.pop %v2247
    %v2249 = vmul.f32 %v2185, 1.442695
    %v2250 = vpow.pop %v2249
    %v2251 = vmul.f32 %v2186, 1.442695
    %v2252 = vpow.pop %v2251
    %v2253 = vmul.f32 %v2187, 1.442695
    %v2254 = vpow.pop %v2253
    %v2255 = vmul.f32 %v2188, 1.442695
    %v2256 = vpow.pop %v2255
    %v2257 = vmul.f32 %v2189, 1.442695
    %v2258 = vpow.pop %v2257
    %v2259 = vmul.f32 %v2190, 1.442695
    %v2260 = vpow.pop %v2259
    %v2261 = vmul.f32 %v2191, 1.442695
    %v2262 = vpow.pop %v2261
    %v2263 = vmul.f32 %v2192, 1.442695
    %v2264 = vpow.pop %v2263
    %v2265 = vmul.f32 %v2193, 1.442695
    %v2266 = vpow.pop %v2265
    %v2267 = vmul.f32 %v2194, 1.442695
    %v2268 = vpow.pop %v2267
    %v2269 = vmul.f32 %v2195, 1.442695
    %v2270 = vpow.pop %v2269
    %v2271 = vmul.f32 %v2196, 1.442695
    %v2272 = vpow.pop %v2271
    %v2273 = vmul.f32 %v2197, 1.442695
    %v2274 = vpow.pop %v2273
    %v2275 = vmul.f32 %v2198, 1.442695
    %v2276 = vpow.pop %v2275
    %v2277 = vmul.f32 %v2199, 1.442695
    %v2278 = vpow.pop %v2277
    %v2279 = vmul.f32 %v2200, 1.442695
    %v2280 = vpow.pop %v2279
    %v2281 = vadd.f32 %v2202, 1.0
    %v2282 = vadd.f32 %v2204, 1.0
    %v2283 = vadd.f32 %v2206, 1.0
    %v2284 = vadd.f32 %v2208, 1.0
    %v2285 = vadd.f32 %v2210, 1.0
    %v2286 = vadd.f32 %v2212, 1.0
    %v2287 = vadd.f32 %v2214, 1.0
    %v2288 = vadd.f32 %v2216, 1.0
    %v2289 = vadd.f32 %v2218, 1.0
    %v2290 = vadd.f32 %v2220, 1.0
    %v2291 = vadd.f32 %v2222, 1.0
    %v2292 = vadd.f32 %v2224, 1.0
    %v2293 = vadd.f32 %v2226, 1.0
    %v2294 = vadd.f32 %v2228, 1.0
    %v2295 = vadd.f32 %v2230, 1.0
    %v2296 = vadd.f32 %v2232, 1.0
    %v2297 = vadd.f32 %v2234, 1.0
    %v2298 = vadd.f32 %v2236, 1.0
    %v2299 = vadd.f32 %v2238, 1.0
    %v2300 = vadd.f32 %v2240, 1.0
    %v2301 = vadd.f32 %v2242, 1.0
    %v2302 = vadd.f32 %v2244, 1.0
    %v2303 = vadd.f32 %v2246, 1.0
    %v2304 = vadd.f32 %v2248, 1.0
    %v2305 = vadd.f32 %v2250, 1.0
    %v2306 = vadd.f32 %v2252, 1.0
    %v2307 = vadd.f32 %v2254, 1.0
    %v2308 = vadd.f32 %v2256, 1.0
    %v2309 = vadd.f32 %v2258, 1.0
    %v2310 = vadd.f32 %v2260, 1.0
    %v2311 = vadd.f32 %v2262, 1.0
    %v2312 = vadd.f32 %v2264, 1.0
    %v2313 = vadd.f32 %v2266, 1.0
    %v2314 = vadd.f32 %v2268, 1.0
    %v2315 = vadd.f32 %v2270, 1.0
    %v2316 = vadd.f32 %v2272, 1.0
    %v2317 = vadd.f32 %v2274, 1.0
    %v2318 = vadd.f32 %v2276, 1.0
    %v2319 = vadd.f32 %v2278, 1.0
    %v2320 = vadd.f32 %v2280, 1.0
    %v2321 = vrcp.pop %v2281
    %v2322 = vmul.f32 1.0, %v2321
    %v2323 = vrcp.pop %v2282
    %v2324 = vmul.f32 1.0, %v2323
    %v2325 = vrcp.pop %v2283
    %v2326 = vmul.f32 1.0, %v2325
    %v2327 = vrcp.pop %v2284
    %v2328 = vmul.f32 1.0, %v2327
    %v2329 = vrcp.pop %v2285
    %v2330 = vmul.f32 1.0, %v2329
    %v2331 = vrcp.pop %v2286
    %v2332 = vmul.f32 1.0, %v2331
    %v2333 = vrcp.pop %v2287
    %v2334 = vmul.f32 1.0, %v2333
    %v2335 = vrcp.pop %v2288
    %v2336 = vmul.f32 1.0, %v2335
    %v2337 = vrcp.pop %v2289
    %v2338 = vmul.f32 1.0, %v2337
    %v2339 = vrcp.pop %v2290
    %v2340 = vmul.f32 1.0, %v2339
    %v2341 = vrcp.pop %v2291
    %v2342 = vmul.f32 1.0, %v2341
    %v2343 = vrcp.pop %v2292
    %v2344 = vmul.f32 1.0, %v2343
    %v2345 = vrcp.pop %v2293
    %v2346 = vmul.f32 1.0, %v2345
    %v2347 = vrcp.pop %v2294
    %v2348 = vmul.f32 1.0, %v2347
    %v2349 = vrcp.pop %v2295
    %v2350 = vmul.f32 1.0, %v2349
    %v2351 = vrcp.pop %v2296
    %v2352 = vmul.f32 1.0, %v2351
    %v2353 = vrcp.pop %v2297
    %v2354 = vmul.f32 1.0, %v2353
    %v2355 = vrcp.pop %v2298
    %v2356 = vmul.f32 1.0, %v2355
    %v2357 = vrcp.pop %v2299
    %v2358 = vmul.f32 1.0, %v2357
    %v2359 = vrcp.pop %v2300
    %v2360 = vmul.f32 1.0, %v2359
    %v2361 = vrcp.pop %v2301
    %v2362 = vmul.f32 1.0, %v2361
    %v2363 = vrcp.pop %v2302
    %v2364 = vmul.f32 1.0, %v2363
    %v2365 = vrcp.pop %v2303
    %v2366 = vmul.f32 1.0, %v2365
    %v2367 = vrcp.pop %v2304
    %v2368 = vmul.f32 1.0, %v2367
    %v2369 = vrcp.pop %v2305
    %v2370 = vmul.f32 1.0, %v2369
    %v2371 = vrcp.pop %v2306
    %v2372 = vmul.f32 1.0, %v2371
    %v2373 = vrcp.pop %v2307
    %v2374 = vmul.f32 1.0, %v2373
    %v2375 = vrcp.pop %v2308
    %v2376 = vmul.f32 1.0, %v2375
    %v2377 = vrcp.pop %v2309
    %v2378 = vmul.f32 1.0, %v2377
    %v2379 = vrcp.pop %v2310
    %v2380 = vmul.f32 1.0, %v2379
    %v2381 = vrcp.pop %v2311
    %v2382 = vmul.f32 1.0, %v2381
    %v2383 = vrcp.pop %v2312
    %v2384 = vmul.f32 1.0, %v2383
    %v2385 = vrcp.pop %v2313
    %v2386 = vmul.f32 1.0, %v2385
    %v2387 = vrcp.pop %v2314
    %v2388 = vmul.f32 1.0, %v2387
    %v2389 = vrcp.pop %v2315
    %v2390 = vmul.f32 1.0, %v2389
    %v2391 = vrcp.pop %v2316
    %v2392 = vmul.f32 1.0, %v2391
    %v2393 = vrcp.pop %v2317
    %v2394 = vmul.f32 1.0, %v2393
    %v2395 = vrcp.pop %v2318
    %v2396 = vmul.f32 1.0, %v2395
    %v2397 = vrcp.pop %v2319
    %v2398 = vmul.f32 1.0, %v2397
    %v2399 = vrcp.pop %v2320
    %v2400 = vmul.f32 1.0, %v2399
    %v2402 = vunpack.c.l.s4 1966171168
    %v2403 = vunpack.c.0.s8 %v2402
    %v2404 = vlaneseq
    %v2405 = vshrl.u32 %v2404, 7
    %v2406 = vsub.s32 %v2403, %v2405
    %v2407 = vrot.slane %v27, %v2406
    %v2409 = vunpack.c.l.s4 1966171168
    %v2410 = vunpack.c.0.s8 %v2409
    %v2411 = vlaneseq
    %v2412 = vshrl.u32 %v2411, 7
    %v2413 = vsub.s32 %v2410, %v2412
    %v2414 = vrot.slane %v43, %v2413
    %v2415 = vcombine.high %v2407, %v2407
    %v2416 = vcombine.high %v2414, %v2414
    %v2418 = vunpack.c.l.s4 1966171168
    %v2419 = vunpack.c.0.s8 %v2418
    %v2420 = vlaneseq
    %v2421 = vshrl.u32 %v2420, 7
    %v2422 = vsub.s32 %v2419, %v2421
    %v2423 = vrot.slane %v2407, %v2422
    %v2425 = vunpack.c.l.s4 1966171168
    %v2426 = vunpack.c.0.s8 %v2425
    %v2427 = vlaneseq
    %v2428 = vshrl.u32 %v2427, 7
    %v2429 = vsub.s32 %v2426, %v2428
    %v2430 = vrot.slane %v2414, %v2429
    %v2432 = vunpack.c.l.s4 1966171168
    %v2433 = vunpack.c.0.s8 %v2432
    %v2434 = vlaneseq
    %v2435 = vshrl.u32 %v2434, 7
    %v2436 = vsub.s32 %v2433, %v2435
    %v2437 = vrot.slane %v2415, %v2436
    %v2439 = vunpack.c.l.s4 1966171168
    %v2440 = vunpack.c.0.s8 %v2439
    %v2441 = vlaneseq
    %v2442 = vshrl.u32 %v2441, 7
    %v2443 = vsub.s32 %v2440, %v2442
    %v2444 = vrot.slane %v2416, %v2443
    %v2445 = vcombine.high %v2423, %v2423
    %v2446 = vcombine.high %v2430, %v2430
    %v2447 = vcombine.high %v2437, %v2437
    %v2448 = vcombine.high %v2444, %v2444
    %v2450 = vunpack.c.l.s4 1966171168
    %v2451 = vunpack.c.0.s8 %v2450
    %v2452 = vlaneseq
    %v2453 = vshrl.u32 %v2452, 7
    %v2454 = vsub.s32 %v2451, %v2453
    %v2455 = vrot.slane %v28, %v2454
    %v2456 = vcombine.high %v2455, %v2455
    %v2458 = vunpack.c.l.s4 1966171168
    %v2459 = vunpack.c.0.s8 %v2458
    %v2460 = vlaneseq
    %v2461 = vshrl.u32 %v2460, 7
    %v2462 = vsub.s32 %v2459, %v2461
    %v2463 = vrot.slane %v2455, %v2462
    %v2465 = vunpack.c.l.s4 1966171168
    %v2466 = vunpack.c.0.s8 %v2465
    %v2467 = vlaneseq
    %v2468 = vshrl.u32 %v2467, 7
    %v2469 = vsub.s32 %v2466, %v2468
    %v2470 = vrot.slane %v2456, %v2469
    %v2472 = vunpack.c.l.s4 1966171168
    %v2473 = vunpack.c.0.s8 %v2472
    %v2474 = vlaneseq
    %v2475 = vshrl.u32 %v2474, 7
    %v2476 = vsub.s32 %v2473, %v2475
    %v2477 = vrot.slane %v29, %v2476
    %v2479 = vunpack.c.l.s4 1966171168
    %v2480 = vunpack.c.0.s8 %v2479
    %v2481 = vlaneseq
    %v2482 = vshrl.u32 %v2481, 7
    %v2483 = vsub.s32 %v2480, %v2482
    %v2484 = vrot.slane %v67, %v2483
    %v2485 = vcombine.high %v2477, %v2477
    %v2486 = vcombine.high %v2484, %v2484
    %v2488 = vunpack.c.l.s4 1966171168
    %v2489 = vunpack.c.0.s8 %v2488
    %v2490 = vlaneseq
    %v2491 = vshrl.u32 %v2490, 7
    %v2492 = vsub.s32 %v2489, %v2491
    %v2493 = vrot.slane %v2477, %v2492
    %v2495 = vunpack.c.l.s4 1966171168
    %v2496 = vunpack.c.0.s8 %v2495
    %v2497 = vlaneseq
    %v2498 = vshrl.u32 %v2497, 7
    %v2499 = vsub.s32 %v2496, %v2498
    %v2500 = vrot.slane %v2484, %v2499
    %v2502 = vunpack.c.l.s4 1966171168
    %v2503 = vunpack.c.0.s8 %v2502
    %v2504 = vlaneseq
    %v2505 = vshrl.u32 %v2504, 7
    %v2506 = vsub.s32 %v2503, %v2505
    %v2507 = vrot.slane %v2485, %v2506
    %v2509 = vunpack.c.l.s4 1966171168
    %v2510 = vunpack.c.0.s8 %v2509
    %v2511 = vlaneseq
    %v2512 = vshrl.u32 %v2511, 7
    %v2513 = vsub.s32 %v2510, %v2512
    %v2514 = vrot.slane %v2486, %v2513
    %v2515 = vcombine.high %v2493, %v2493
    %v2516 = vcombine.high %v2500, %v2500
    %v2517 = vcombine.high %v2507, %v2507
    %v2518 = vcombine.high %v2514, %v2514
    %v2520 = vunpack.c.l.s4 1966171168
    %v2521 = vunpack.c.0.s8 %v2520
    %v2522 = vlaneseq
    %v2523 = vshrl.u32 %v2522, 7
    %v2524 = vsub.s32 %v2521, %v2523
    %v2525 = vrot.slane %v30, %v2524
    %v2526 = vcombine.high %v2525, %v2525
    %v2528 = vunpack.c.l.s4 1966171168
    %v2529 = vunpack.c.0.s8 %v2528
    %v2530 = vlaneseq
    %v2531 = vshrl.u32 %v2530, 7
    %v2532 = vsub.s32 %v2529, %v2531
    %v2533 = vrot.slane %v2525, %v2532
    %v2535 = vunpack.c.l.s4 1966171168
    %v2536 = vunpack.c.0.s8 %v2535
    %v2537 = vlaneseq
    %v2538 = vshrl.u32 %v2537, 7
    %v2539 = vsub.s32 %v2536, %v2538
    %v2540 = vrot.slane %v2526, %v2539
    %v2542 = vunpack.c.l.s4 1966171168
    %v2543 = vunpack.c.0.s8 %v2542
    %v2544 = vlaneseq
    %v2545 = vshrl.u32 %v2544, 7
    %v2546 = vsub.s32 %v2543, %v2545
    %v2547 = vrot.slane %v31, %v2546
    %v2549 = vunpack.c.l.s4 1966171168
    %v2550 = vunpack.c.0.s8 %v2549
    %v2551 = vlaneseq
    %v2552 = vshrl.u32 %v2551, 7
    %v2553 = vsub.s32 %v2550, %v2552
    %v2554 = vrot.slane %v91, %v2553
    %v2555 = vcombine.high %v2547, %v2547
    %v2556 = vcombine.high %v2554, %v2554
    %v2558 = vunpack.c.l.s4 1966171168
    %v2559 = vunpack.c.0.s8 %v2558
    %v2560 = vlaneseq
    %v2561 = vshrl.u32 %v2560, 7
    %v2562 = vsub.s32 %v2559, %v2561
    %v2563 = vrot.slane %v2547, %v2562
    %v2565 = vunpack.c.l.s4 1966171168
    %v2566 = vunpack.c.0.s8 %v2565
    %v2567 = vlaneseq
    %v2568 = vshrl.u32 %v2567, 7
    %v2569 = vsub.s32 %v2566, %v2568
    %v2570 = vrot.slane %v2554, %v2569
    %v2572 = vunpack.c.l.s4 1966171168
    %v2573 = vunpack.c.0.s8 %v2572
    %v2574 = vlaneseq
    %v2575 = vshrl.u32 %v2574, 7
    %v2576 = vsub.s32 %v2573, %v2575
    %v2577 = vrot.slane %v2555, %v2576
    %v2579 = vunpack.c.l.s4 1966171168
    %v2580 = vunpack.c.0.s8 %v2579
    %v2581 = vlaneseq
    %v2582 = vshrl.u32 %v2581, 7
    %v2583 = vsub.s32 %v2580, %v2582
    %v2584 = vrot.slane %v2556, %v2583
    %v2585 = vcombine.high %v2563, %v2563
    %v2586 = vcombine.high %v2570, %v2570
    %v2587 = vcombine.high %v2577, %v2577
    %v2588 = vcombine.high %v2584, %v2584
    %v2590 = vunpack.c.l.s4 1966171168
    %v2591 = vunpack.c.0.s8 %v2590
    %v2592 = vlaneseq
    %v2593 = vshrl.u32 %v2592, 7
    %v2594 = vsub.s32 %v2591, %v2593
    %v2595 = vrot.slane %v32, %v2594
    %v2596 = vcombine.high %v2595, %v2595
    %v2598 = vunpack.c.l.s4 1966171168
    %v2599 = vunpack.c.0.s8 %v2598
    %v2600 = vlaneseq
    %v2601 = vshrl.u32 %v2600, 7
    %v2602 = vsub.s32 %v2599, %v2601
    %v2603 = vrot.slane %v2595, %v2602
    %v2605 = vunpack.c.l.s4 1966171168
    %v2606 = vunpack.c.0.s8 %v2605
    %v2607 = vlaneseq
    %v2608 = vshrl.u32 %v2607, 7
    %v2609 = vsub.s32 %v2606, %v2608
    %v2610 = vrot.slane %v2596, %v2609
    %v2612 = vunpack.c.l.s4 1966171168
    %v2613 = vunpack.c.0.s8 %v2612
    %v2614 = vlaneseq
    %v2615 = vshrl.u32 %v2614, 7
    %v2616 = vsub.s32 %v2613, %v2615
    %v2617 = vrot.slane %v33, %v2616
    %v2619 = vunpack.c.l.s4 1966171168
    %v2620 = vunpack.c.0.s8 %v2619
    %v2621 = vlaneseq
    %v2622 = vshrl.u32 %v2621, 7
    %v2623 = vsub.s32 %v2620, %v2622
    %v2624 = vrot.slane %v115, %v2623
    %v2625 = vcombine.high %v2617, %v2617
    %v2626 = vcombine.high %v2624, %v2624
    %v2628 = vunpack.c.l.s4 1966171168
    %v2629 = vunpack.c.0.s8 %v2628
    %v2630 = vlaneseq
    %v2631 = vshrl.u32 %v2630, 7
    %v2632 = vsub.s32 %v2629, %v2631
    %v2633 = vrot.slane %v2617, %v2632
    %v2635 = vunpack.c.l.s4 1966171168
    %v2636 = vunpack.c.0.s8 %v2635
    %v2637 = vlaneseq
    %v2638 = vshrl.u32 %v2637, 7
    %v2639 = vsub.s32 %v2636, %v2638
    %v2640 = vrot.slane %v2624, %v2639
    %v2642 = vunpack.c.l.s4 1966171168
    %v2643 = vunpack.c.0.s8 %v2642
    %v2644 = vlaneseq
    %v2645 = vshrl.u32 %v2644, 7
    %v2646 = vsub.s32 %v2643, %v2645
    %v2647 = vrot.slane %v2625, %v2646
    %v2649 = vunpack.c.l.s4 1966171168
    %v2650 = vunpack.c.0.s8 %v2649
    %v2651 = vlaneseq
    %v2652 = vshrl.u32 %v2651, 7
    %v2653 = vsub.s32 %v2650, %v2652
    %v2654 = vrot.slane %v2626, %v2653
    %v2655 = vcombine.high %v2633, %v2633
    %v2656 = vcombine.high %v2640, %v2640
    %v2657 = vcombine.high %v2647, %v2647
    %v2658 = vcombine.high %v2654, %v2654
    %v2660 = vunpack.c.l.s4 1966171168
    %v2661 = vunpack.c.0.s8 %v2660
    %v2662 = vlaneseq
    %v2663 = vshrl.u32 %v2662, 7
    %v2664 = vsub.s32 %v2661, %v2663
    %v2665 = vrot.slane %v34, %v2664
    %v2666 = vcombine.high %v2665, %v2665
    %v2668 = vunpack.c.l.s4 1966171168
    %v2669 = vunpack.c.0.s8 %v2668
    %v2670 = vlaneseq
    %v2671 = vshrl.u32 %v2670, 7
    %v2672 = vsub.s32 %v2669, %v2671
    %v2673 = vrot.slane %v2665, %v2672
    %v2675 = vunpack.c.l.s4 1966171168
    %v2676 = vunpack.c.0.s8 %v2675
    %v2677 = vlaneseq
    %v2678 = vshrl.u32 %v2677, 7
    %v2679 = vsub.s32 %v2676, %v2678
    %v2680 = vrot.slane %v2666, %v2679
    %v2681 = vlaneseq
    %v2682 = vshrl.u32 %v2681, 7
    %v2683 = vsub.s32 0, %v2682
    %v2684 = vrot.slane %v2423, %v2683
    %v2685 = vlaneseq
    %v2686 = vshrl.u32 %v2685, 7
    %v2687 = vsub.s32 0, %v2686
    %v2688 = vrot.slane %v2437, %v2687
    %v2689 = vlaneseq
    %v2690 = vshrl.u32 %v2689, 7
    %v2691 = vsub.s32 0, %v2690
    %v2692 = vrot.slane %v2445, %v2691
    %v2693 = vlaneseq
    %v2694 = vshrl.u32 %v2693, 7
    %v2695 = vsub.s32 0, %v2694
    %v2696 = vrot.slane %v2447, %v2695
    %v2697 = vlaneseq
    %v2698 = vshrl.u32 %v2697, 7
    %v2699 = vsub.s32 0, %v2698
    %v2700 = vrot.slane %v2430, %v2699
    %v2701 = vlaneseq
    %v2702 = vshrl.u32 %v2701, 7
    %v2703 = vsub.s32 0, %v2702
    %v2704 = vrot.slane %v2444, %v2703
    %v2705 = vlaneseq
    %v2706 = vshrl.u32 %v2705, 7
    %v2707 = vsub.s32 0, %v2706
    %v2708 = vrot.slane %v2446, %v2707
    %v2709 = vlaneseq
    %v2710 = vshrl.u32 %v2709, 7
    %v2711 = vsub.s32 0, %v2710
    %v2712 = vrot.slane %v2448, %v2711
    %v2713 = vlaneseq
    %v2714 = vshrl.u32 %v2713, 7
    %v2715 = vsub.s32 0, %v2714
    %v2716 = vrot.slane %v2463, %v2715
    %v2717 = vlaneseq
    %v2718 = vshrl.u32 %v2717, 7
    %v2719 = vsub.s32 0, %v2718
    %v2720 = vrot.slane %v2470, %v2719
    %v2721 = vlaneseq
    %v2722 = vshrl.u32 %v2721, 7
    %v2723 = vsub.s32 0, %v2722
    %v2724 = vrot.slane %v2493, %v2723
    %v2725 = vlaneseq
    %v2726 = vshrl.u32 %v2725, 7
    %v2727 = vsub.s32 0, %v2726
    %v2728 = vrot.slane %v2507, %v2727
    %v2729 = vlaneseq
    %v2730 = vshrl.u32 %v2729, 7
    %v2731 = vsub.s32 0, %v2730
    %v2732 = vrot.slane %v2515, %v2731
    %v2733 = vlaneseq
    %v2734 = vshrl.u32 %v2733, 7
    %v2735 = vsub.s32 0, %v2734
    %v2736 = vrot.slane %v2517, %v2735
    %v2737 = vlaneseq
    %v2738 = vshrl.u32 %v2737, 7
    %v2739 = vsub.s32 0, %v2738
    %v2740 = vrot.slane %v2500, %v2739
    %v2741 = vlaneseq
    %v2742 = vshrl.u32 %v2741, 7
    %v2743 = vsub.s32 0, %v2742
    %v2744 = vrot.slane %v2514, %v2743
    %v2745 = vlaneseq
    %v2746 = vshrl.u32 %v2745, 7
    %v2747 = vsub.s32 0, %v2746
    %v2748 = vrot.slane %v2516, %v2747
    %v2749 = vlaneseq
    %v2750 = vshrl.u32 %v2749, 7
    %v2751 = vsub.s32 0, %v2750
    %v2752 = vrot.slane %v2518, %v2751
    %v2753 = vlaneseq
    %v2754 = vshrl.u32 %v2753, 7
    %v2755 = vsub.s32 0, %v2754
    %v2756 = vrot.slane %v2533, %v2755
    %v2757 = vlaneseq
    %v2758 = vshrl.u32 %v2757, 7
    %v2759 = vsub.s32 0, %v2758
    %v2760 = vrot.slane %v2540, %v2759
    %v2761 = vlaneseq
    %v2762 = vshrl.u32 %v2761, 7
    %v2763 = vsub.s32 0, %v2762
    %v2764 = vrot.slane %v2563, %v2763
    %v2765 = vlaneseq
    %v2766 = vshrl.u32 %v2765, 7
    %v2767 = vsub.s32 0, %v2766
    %v2768 = vrot.slane %v2577, %v2767
    %v2769 = vlaneseq
    %v2770 = vshrl.u32 %v2769, 7
    %v2771 = vsub.s32 0, %v2770
    %v2772 = vrot.slane %v2585, %v2771
    %v2773 = vlaneseq
    %v2774 = vshrl.u32 %v2773, 7
    %v2775 = vsub.s32 0, %v2774
    %v2776 = vrot.slane %v2587, %v2775
    %v2777 = vlaneseq
    %v2778 = vshrl.u32 %v2777, 7
    %v2779 = vsub.s32 0, %v2778
    %v2780 = vrot.slane %v2570, %v2779
    %v2781 = vlaneseq
    %v2782 = vshrl.u32 %v2781, 7
    %v2783 = vsub.s32 0, %v2782
    %v2784 = vrot.slane %v2584, %v2783
    %v2785 = vlaneseq
    %v2786 = vshrl.u32 %v2785, 7
    %v2787 = vsub.s32 0, %v2786
    %v2788 = vrot.slane %v2586, %v2787
    %v2789 = vlaneseq
    %v2790 = vshrl.u32 %v2789, 7
    %v2791 = vsub.s32 0, %v2790
    %v2792 = vrot.slane %v2588, %v2791
    %v2793 = vlaneseq
    %v2794 = vshrl.u32 %v2793, 7
    %v2795 = vsub.s32 0, %v2794
    %v2796 = vrot.slane %v2603, %v2795
    %v2797 = vlaneseq
    %v2798 = vshrl.u32 %v2797, 7
    %v2799 = vsub.s32 0, %v2798
    %v2800 = vrot.slane %v2610, %v2799
    %v2801 = vlaneseq
    %v2802 = vshrl.u32 %v2801, 7
    %v2803 = vsub.s32 0, %v2802
    %v2804 = vrot.slane %v2633, %v2803
    %v2805 = vlaneseq
    %v2806 = vshrl.u32 %v2805, 7
    %v2807 = vsub.s32 0, %v2806
    %v2808 = vrot.slane %v2647, %v2807
    %v2809 = vlaneseq
    %v2810 = vshrl.u32 %v2809, 7
    %v2811 = vsub.s32 0, %v2810
    %v2812 = vrot.slane %v2655, %v2811
    %v2813 = vlaneseq
    %v2814 = vshrl.u32 %v2813, 7
    %v2815 = vsub.s32 0, %v2814
    %v2816 = vrot.slane %v2657, %v2815
    %v2817 = vlaneseq
    %v2818 = vshrl.u32 %v2817, 7
    %v2819 = vsub.s32 0, %v2818
    %v2820 = vrot.slane %v2640, %v2819
    %v2821 = vlaneseq
    %v2822 = vshrl.u32 %v2821, 7
    %v2823 = vsub.s32 0, %v2822
    %v2824 = vrot.slane %v2654, %v2823
    %v2825 = vlaneseq
    %v2826 = vshrl.u32 %v2825, 7
    %v2827 = vsub.s32 0, %v2826
    %v2828 = vrot.slane %v2656, %v2827
    %v2829 = vlaneseq
    %v2830 = vshrl.u32 %v2829, 7
    %v2831 = vsub.s32 0, %v2830
    %v2832 = vrot.slane %v2658, %v2831
    %v2833 = vlaneseq
    %v2834 = vshrl.u32 %v2833, 7
    %v2835 = vsub.s32 0, %v2834
    %v2836 = vrot.slane %v2673, %v2835
    %v2837 = vlaneseq
    %v2838 = vshrl.u32 %v2837, 7
    %v2839 = vsub.s32 0, %v2838
    %v2840 = vrot.slane %v2680, %v2839
    %v2881 = vmul.f32 %v2322, %v2684
    %v2882 = vmul.f32 %v2324, %v2688
    %v2883 = vmul.f32 %v2326, %v2692
    %v2884 = vmul.f32 %v2328, %v2696
    %v2885 = vmul.f32 %v2330, %v2700
    %v2886 = vmul.f32 %v2332, %v2704
    %v2887 = vmul.f32 %v2334, %v2708
    %v2888 = vmul.f32 %v2336, %v2712
    %v2889 = vmul.f32 %v2338, %v2716
    %v2890 = vmul.f32 %v2340, %v2720
    %v2891 = vmul.f32 %v2342, %v2724
    %v2892 = vmul.f32 %v2344, %v2728
    %v2893 = vmul.f32 %v2346, %v2732
    %v2894 = vmul.f32 %v2348, %v2736
    %v2895 = vmul.f32 %v2350, %v2740
    %v2896 = vmul.f32 %v2352, %v2744
    %v2897 = vmul.f32 %v2354, %v2748
    %v2898 = vmul.f32 %v2356, %v2752
    %v2899 = vmul.f32 %v2358, %v2756
    %v2900 = vmul.f32 %v2360, %v2760
    %v2901 = vmul.f32 %v2362, %v2764
    %v2902 = vmul.f32 %v2364, %v2768
    %v2903 = vmul.f32 %v2366, %v2772
    %v2904 = vmul.f32 %v2368, %v2776
    %v2905 = vmul.f32 %v2370, %v2780
    %v2906 = vmul.f32 %v2372, %v2784
    %v2907 = vmul.f32 %v2374, %v2788
    %v2908 = vmul.f32 %v2376, %v2792
    %v2909 = vmul.f32 %v2378, %v2796
    %v2910 = vmul.f32 %v2380, %v2800
    %v2911 = vmul.f32 %v2382, %v2804
    %v2912 = vmul.f32 %v2384, %v2808
    %v2913 = vmul.f32 %v2386, %v2812
    %v2914 = vmul.f32 %v2388, %v2816
    %v2915 = vmul.f32 %v2390, %v2820
    %v2916 = vmul.f32 %v2392, %v2824
    %v2917 = vmul.f32 %v2394, %v2828
    %v2918 = vmul.f32 %v2396, %v2832
    %v2919 = vmul.f32 %v2398, %v2836
    %v2920 = vmul.f32 %v2400, %v2840
    %v2921 = vsel %vm249, %v2881, 0.0
    %v2922 = vsel %vm249, %v2882, 0.0
    %v2923 = vadd.f32 %v2921, %v2922
    %v2924 = vsel %vm249, %v2883, 0.0
    %v2925 = vadd.f32 %v2923, %v2924
    %v2926 = vsel %vm249, %v2884, 0.0
    %v2927 = vadd.f32 %v2925, %v2926
    %v2928 = vsel %vm249, %v2885, 0.0
    %v2929 = vadd.f32 %v2927, %v2928
    %v2930 = vsel %vm249, %v2886, 0.0
    %v2931 = vadd.f32 %v2929, %v2930
    %v2932 = vsel %vm249, %v2887, 0.0
    %v2933 = vadd.f32 %v2931, %v2932
    %v2934 = vsel %vm249, %v2888, 0.0
    %v2935 = vadd.f32 %v2933, %v2934
    %v2936 = vsel %vm249, %v2889, 0.0
    %v2937 = vadd.f32 %v2935, %v2936
    %v2938 = vsel %vm249, %v2890, 0.0
    %v2939 = vadd.f32 %v2937, %v2938
    %v2940 = vsel %vm249, %v2891, 0.0
    %v2941 = vsel %vm249, %v2892, 0.0
    %v2942 = vadd.f32 %v2940, %v2941
    %v2943 = vsel %vm249, %v2893, 0.0
    %v2944 = vadd.f32 %v2942, %v2943
    %v2945 = vsel %vm249, %v2894, 0.0
    %v2946 = vadd.f32 %v2944, %v2945
    %v2947 = vsel %vm249, %v2895, 0.0
    %v2948 = vadd.f32 %v2946, %v2947
    %v2949 = vsel %vm249, %v2896, 0.0
    %v2950 = vadd.f32 %v2948, %v2949
    %v2951 = vsel %vm249, %v2897, 0.0
    %v2952 = vadd.f32 %v2950, %v2951
    %v2953 = vsel %vm249, %v2898, 0.0
    %v2954 = vadd.f32 %v2952, %v2953
    %v2955 = vsel %vm249, %v2899, 0.0
    %v2956 = vadd.f32 %v2954, %v2955
    %v2957 = vsel %vm249, %v2900, 0.0
    %v2958 = vadd.f32 %v2956, %v2957
    %v2959 = vsel %vm249, %v2901, 0.0
    %v2960 = vsel %vm249, %v2902, 0.0
    %v2961 = vadd.f32 %v2959, %v2960
    %v2962 = vsel %vm249, %v2903, 0.0
    %v2963 = vadd.f32 %v2961, %v2962
    %v2964 = vsel %vm249, %v2904, 0.0
    %v2965 = vadd.f32 %v2963, %v2964
    %v2966 = vsel %vm249, %v2905, 0.0
    %v2967 = vadd.f32 %v2965, %v2966
    %v2968 = vsel %vm249, %v2906, 0.0
    %v2969 = vadd.f32 %v2967, %v2968
    %v2970 = vsel %vm249, %v2907, 0.0
    %v2971 = vadd.f32 %v2969, %v2970
    %v2972 = vsel %vm249, %v2908, 0.0
    %v2973 = vadd.f32 %v2971, %v2972
    %v2974 = vsel %vm249, %v2909, 0.0
    %v2975 = vadd.f32 %v2973, %v2974
    %v2976 = vsel %vm249, %v2910, 0.0
    %v2977 = vadd.f32 %v2975, %v2976
    %v2978 = vsel %vm249, %v2911, 0.0
    %v2979 = vsel %vm249, %v2912, 0.0
    %v2980 = vadd.f32 %v2978, %v2979
    %v2981 = vsel %vm249, %v2913, 0.0
    %v2982 = vadd.f32 %v2980, %v2981
    %v2983 = vsel %vm249, %v2914, 0.0
    %v2984 = vadd.f32 %v2982, %v2983
    %v2985 = vsel %vm249, %v2915, 0.0
    %v2986 = vadd.f32 %v2984, %v2985
    %v2987 = vsel %vm249, %v2916, 0.0
    %v2988 = vadd.f32 %v2986, %v2987
    %v2989 = vsel %vm249, %v2917, 0.0
    %v2990 = vadd.f32 %v2988, %v2989
    %v2991 = vsel %vm249, %v2918, 0.0
    %v2992 = vadd.f32 %v2990, %v2991
    %v2993 = vsel %vm249, %v2919, 0.0
    %v2994 = vadd.f32 %v2992, %v2993
    %v2995 = vsel %vm249, %v2920, 0.0
    %v2996 = vadd.f32 %v2994, %v2995
    %2997 = vst.msk [vmem:[#allocation2] sm:$0xff] %vm249, %v2939
    %2998 = vst.msk [vmem:[#allocation2 + $0x8] sm:$0xff] %vm249, %v2958
    %2999 = vst.msk [vmem:[#allocation2 + $0x10] sm:$0xff] %vm249, %v2977
    %3000 = vst.msk [vmem:[#allocation2 + $0x18] sm:$0xff] %vm249, %v2996
    // Predicated region
    $region30: #{tpu_custom_call.1} parent=1 // pred_check
      _
    $region31: #{tpu_custom_call.1} parent=1 // pred_check_branch
      %3002 = sbr.rel (0) target = $region33
    $region32: #{tpu_custom_call.1} parent=1 // pred_region
      %s3004 = ssub.s32 512, 512
      %3005 = vsyncadd [#allocation3], %s3004
      %s3006 = sshll.u32 [#allocation2], 4
      %s3007 = int_to_ptr.vmem [resolvable:$true] %s3006
      %3012 = dma.vmem_to_hbm [thread:$0]  %s3007, 512, %s7, [#allocation3], 128, 128, 8
    $region33: #{tpu_custom_call.1} parent=1 // pred_fallthru
      _
    // Predicated region
    $region34: #{tpu_custom_call.1} parent=1 // pred_check
      _
    $region35: #{tpu_custom_call.1} parent=1 // pred_check_branch
      %3014 = sbr.rel (0) target = $region37
    $region36: #{tpu_custom_call.1} parent=1 // pred_region
      %3015 = dma.done [#allocation3], 512
    $region37: #{tpu_custom_call.1} parent=1 // pred_fallthru
      _
    %3016 = vsyncpa [#allocation3], 1

</llo_original>
